<compile_context>
chip_gen: v6e
topology: v6e:2x2x1
jax: 0.10.0
libtpu: 0.0.40
codegen_flags: <defaults>
</compile_context>

<pallas_src>
import jax
import jax.numpy as jnp
from jax.experimental import pallas as pl
from jax.experimental.pallas import tpu as pltpu


# ----------------------------------------------------------------------------
# Pallas kernel: one (batch, q-tile) grid step of the fused attention.
# Refs: x (1,C,N) f32 | A (C,C) bf16 | u (1,C) f32 | Wv^T (C,C) bf16 |
#       bv (C,1) f32 | gamma (1,1) f32 in SMEM | out (1,C,tq) f32.
# ----------------------------------------------------------------------------
def _self_attn_kernel(x_ref, a_ref, u_ref, wvt_ref, bv_ref, g_ref, o_ref):
    N = x_ref.shape[-1]
    tq = o_ref.shape[-1]

    x_cn = x_ref[0]                                      # (C, N) f32
    xk = x_cn.astype(jnp.bfloat16)                       # keys/values operand (bf16)
    # TODO(synk): for tq < N (large images) pass a pre-cast bf16 K/V copy (or a
    # flash-style key-tiled grid axis) instead of re-casting (C, N) every q-tile.

    if tq == N:
        xq_cn = x_cn                                     # (C, tq) f32 query slice
    else:
        q_start = pl.multiple_of(pl.program_id(1) * tq, tq)
        xq_cn = x_ref[0, :, pl.ds(q_start, tq)]

    # Q path: effective query rows qe_i = x_i @ A + u  (A = Wq Wk^T, u = Wk bq).
    # One 32-bit XLU transpose of the small query slice, then natural MXU matmuls.
    q_nc = jnp.transpose(xq_cn).astype(jnp.bfloat16)                     # (tq, C)
    qe = jnp.dot(q_nc, a_ref[...],
                 preferred_element_type=jnp.float32) + u_ref[...]        # (tq, C)

    # energy[i, j] = qe_i . x_j — keys on the lane axis so softmax reduces over lanes.
    energy = jnp.dot(qe.astype(jnp.bfloat16), xk,
                     preferred_element_type=jnp.float32)                 # (tq, N)
    energy = energy - jnp.max(energy, axis=-1, keepdims=True)
    p = jnp.exp(energy)
    attn = p * pl.reciprocal(jnp.sum(p, axis=-1, keepdims=True), approx=True)

    # Value path (reassociated): y = x @ attn^T ; out = Wv^T y + bv.
    # Exact vs. (Wv x + bv) attn^T because each softmax row sums to 1.
    y_cn = jax.lax.dot_general(
        xk, attn.astype(jnp.bfloat16),
        dimension_numbers=(((1,), (1,)), ((), ())),
        preferred_element_type=jnp.float32)                              # (C, tq)
    out = jnp.dot(wvt_ref[...], y_cn.astype(jnp.bfloat16),
                  preferred_element_type=jnp.float32) + bv_ref[...]      # (C, tq)

    # gamma * out + x  (residual f32-exact; gamma read as a scalar from SMEM).
    o_ref[0] = g_ref[0, 0] * out + xq_cn


def _pick_tq(n):
    if n <= 512:
        return n
    for cand in (512, 384, 256, 128):
        if n % cand == 0:
            return cand
    # TODO(synk): pad N to a multiple of 128 for awkward sizes instead of one big tile.
    return n


# ----------------------------------------------------------------------------
# Wrapper: NCHW public interface; (B, C, N) channel-major inside (free reshapes).
# Projection weights are stored (Cin, Cout) — same math as the 1x1 convs.
# ----------------------------------------------------------------------------
def self_attn_dynamic(x_nchw, wq, bq, wk, bk, wv, bv, gamma, *, tq=None):
    del bk  # exact fold: bk only shifts each softmax row by a constant.
    B, C, H, W = x_nchw.shape
    N = H * W
    if tq is None or N % tq != 0:
        tq = _pick_tq(N)

    x_cn = x_nchw.reshape(B, C, N).astype(jnp.float32)   # free reshape, no transpose

    # Tiny parameter folds (Cq = C//8 path collapsed into one C-deep contraction).
    a_mat = jnp.dot(wq, wk.T).astype(jnp.bfloat16)       # (C, C)  A = Wq Wk^T
    u_vec = jnp.dot(wk, bq).reshape(1, C).astype(jnp.float32)
    wvt = wv.T.astype(jnp.bfloat16)                      # (Cout, Cin)
    bv_c1 = bv.reshape(C, 1).astype(jnp.float32)
    g_smem = gamma.reshape(1, 1).astype(jnp.float32)

    out = pl.pallas_call(
        _self_attn_kernel,
        out_shape=jax.ShapeDtypeStruct((B, C, N), jnp.float32),
        grid=(B, N // tq),
        in_specs=[
            pl.BlockSpec((1, C, N), lambda b, q: (b, 0, 0)),    # x: K/V + Q + residual
            pl.BlockSpec((C, C), lambda b, q: (0, 0)),          # A = Wq Wk^T  (bf16)
            pl.BlockSpec((1, C), lambda b, q: (0, 0)),          # u = Wk bq    (f32)
            pl.BlockSpec((C, C), lambda b, q: (0, 0)),          # Wv^T         (bf16)
            pl.BlockSpec((C, 1), lambda b, q: (0, 0)),          # bv           (f32)
            pl.BlockSpec(memory_space=pltpu.MemorySpace.SMEM),  # gamma scalar
        ],
        out_specs=pl.BlockSpec((1, C, tq), lambda b, q: (b, 0, q)),
        compiler_params=pltpu.CompilerParams(
            dimension_semantics=("parallel", "parallel")),
    )(x_cn, a_mat, u_vec, wvt, bv_c1, g_smem)

    return out.reshape(B, C, H, W)


# ----------------------------------------------------------------------------
# Pure-JAX reference (mirrors the PyTorch forward literally) for validation.
# ----------------------------------------------------------------------------
def self_attn_reference(x, wq, bq, wk, bk, wv, bv, gamma):
    B, C, H, W = x.shape
    N = H * W
    xf = x.reshape(B, C, N)                                          # (B, C, N)
    q = jnp.einsum("bcn,cd->bnd", xf, wq) + bq                       # (B, N, Cq)
    k = jnp.einsum("bcn,cd->bdn", xf, wk) + bk[None, :, None]        # (B, Cq, N)
    energy = jnp.einsum("bnd,bdm->bnm", q, k)                        # (B, N, N)
    attn = jax.nn.softmax(energy, axis=-1)
    v = jnp.einsum("bcn,cd->bdn", xf, wv) + bv[None, :, None]        # (B, C, N)
    out = jnp.einsum("bcn,bmn->bcm", v, attn).reshape(B, C, H, W)
    return gamma * out + x


if __name__ == "__main__":
    key = jax.random.PRNGKey(0)
    B, C, H, W = 2, 64, 16, 16          # Self_Attn_dynamic(64) at 16x16 (SAGAN generator)
    Cq = C // 8
    ks = jax.random.split(key, 8)
    s = 0.05

    x = jax.random.normal(ks[0], (B, C, H, W), jnp.float32)
    wq = s * jax.random.normal(ks[1], (C, Cq), jnp.float32)
    bq = s * jax.random.normal(ks[2], (Cq,), jnp.float32)
    wk = s * jax.random.normal(ks[3], (C, Cq), jnp.float32)
    bk = s * jax.random.normal(ks[4], (Cq,), jnp.float32)
    wv = s * jax.random.normal(ks[5], (C, C), jnp.float32)
    bv = s * jax.random.normal(ks[6], (C,), jnp.float32)
    # PyTorch initialises gamma = 0 (out == x exactly); use a nonzero gamma so the
    # attention path is actually exercised and checked.
    gamma = jnp.array([0.75], jnp.float32)

    out = jax.jit(self_attn_dynamic)(x, wq, bq, wk, bk, wv, bv, gamma)
    out = jax.block_until_ready(out)

    assert out.shape == (B, C, H, W), out.shape
    assert bool(jnp.isfinite(out).all())

    ref = self_attn_reference(x, wq, bq, wk, bk, wv, bv, gamma)
    max_err = float(jnp.max(jnp.abs(out - ref)))
    assert max_err < 2e-2, f"max abs err vs reference: {max_err}"

    print("KERNEL_OK")
</pallas_src>

<mosaic_0001>
module attributes {stable_mosaic.version = 11 : i64} {
  func.func @_self_attn_kernel(%arg0: i32, %arg1: i32, %arg2: memref<1x64x256xf32, #tpu.memory_space<vmem>>, %arg3: memref<64x64xbf16, #tpu.memory_space<vmem>>, %arg4: memref<1x64xf32, #tpu.memory_space<vmem>>, %arg5: memref<64x64xbf16, #tpu.memory_space<vmem>>, %arg6: memref<64x1xf32, #tpu.memory_space<vmem>>, %arg7: memref<1x1xf32, #tpu.memory_space<smem>>, %arg8: memref<1x64x256xf32, #tpu.memory_space<vmem>>) attributes {dimension_semantics = [#tpu.dimension_semantics<parallel>, #tpu.dimension_semantics<parallel>], iteration_bounds = array<i64: 2, 1>, scalar_prefetch = 0 : i64, scratch_operands = 0 : i64, tpu.core_type = #tpu.core_type<tc>, window_params = [{transform_indices = @transform_0, window_bounds = array<i64: 1, 64, 256>}, {pipeline_mode = #tpu.pipeline_mode<synchronous>, transform_indices = @transform_1, window_bounds = array<i64: 64, 64>}, {pipeline_mode = #tpu.pipeline_mode<synchronous>, transform_indices = @transform_2, window_bounds = array<i64: 1, 64>}, {pipeline_mode = #tpu.pipeline_mode<synchronous>, transform_indices = @transform_3, window_bounds = array<i64: 64, 64>}, {pipeline_mode = #tpu.pipeline_mode<synchronous>, transform_indices = @transform_4, window_bounds = array<i64: 64, 1>}, {transform_indices = @transform_5, window_bounds = array<i64: 1, 1>}, {transform_indices = @transform_6, window_bounds = array<i64: 1, 64, 256>}]} {
    %c0 = arith.constant 0 : index
    %c0_0 = arith.constant 0 : index
    %c0_1 = arith.constant 0 : index
    %0 = vector.load %arg2[%c0, %c0_0, %c0_1] : memref<1x64x256xf32, #tpu.memory_space<vmem>>, vector<1x64x256xf32>
    %1 = vector.shape_cast %0 : vector<1x64x256xf32> to vector<64x256xf32>
    %2 = arith.truncf %1 : vector<64x256xf32> to vector<64x256xbf16>
    %3 = tpu.transpose %1, [1, 0] : vector<64x256xf32> -> vector<256x64xf32>
    %4 = arith.truncf %3 : vector<256x64xf32> to vector<256x64xbf16>
    %c0_2 = arith.constant 0 : index
    %c0_3 = arith.constant 0 : index
    %5 = vector.load %arg3[%c0_2, %c0_3] : memref<64x64xbf16, #tpu.memory_space<vmem>>, vector<64x64xbf16>
    %cst = arith.constant dense<0.000000e+00> : vector<256x64xf32>
    %6 = tpu.matmul %4, %5, %cst {dimension_numbers = #tpu.dot_dimension_numbers<[1], [0], [0], [1], [0, 0, 1, 1], [], []>} : vector<256x64xbf16>, vector<64x64xbf16>, vector<256x64xf32> -> vector<256x64xf32>
    %c0_4 = arith.constant 0 : index
    %c0_5 = arith.constant 0 : index
    %7 = vector.load %arg4[%c0_4, %c0_5] : memref<1x64xf32, #tpu.memory_space<vmem>>, vector<1x64xf32>
    %8 = vector.broadcast %7 : vector<1x64xf32> to vector<256x64xf32>
    %9 = arith.addf %6, %8 : vector<256x64xf32>
    %10 = arith.truncf %9 : vector<256x64xf32> to vector<256x64xbf16>
    %cst_6 = arith.constant dense<0.000000e+00> : vector<256x256xf32>
    %11 = tpu.matmul %10, %2, %cst_6 {dimension_numbers = #tpu.dot_dimension_numbers<[1], [0], [0], [1], [0, 0, 1, 1], [], []>} : vector<256x64xbf16>, vector<64x256xbf16>, vector<256x256xf32> -> vector<256x256xf32>
    %cst_7 = arith.constant dense<0xFF800000> : vector<256xf32>
    %12 = vector.multi_reduction <maximumf>, %11, %cst_7 [1] : vector<256x256xf32> to vector<256xf32>
    %13 = vector.shape_cast %12 : vector<256xf32> to vector<256x1xf32>
    %14 = vector.broadcast %13 : vector<256x1xf32> to vector<256x256xf32>
    %15 = arith.subf %11, %14 : vector<256x256xf32>
    %16 = math.exp %15 : vector<256x256xf32>
    %cst_8 = arith.constant dense<0.000000e+00> : vector<256xf32>
    %17 = vector.multi_reduction <add>, %16, %cst_8 [1] : vector<256x256xf32> to vector<256xf32>
    %18 = vector.shape_cast %17 : vector<256xf32> to vector<256x1xf32>
    %19 = tpu.reciprocal %18 {approx = true} : vector<256x1xf32> -> vector<256x1xf32>
    %20 = vector.broadcast %19 : vector<256x1xf32> to vector<256x256xf32>
    %21 = arith.mulf %16, %20 : vector<256x256xf32>
    %22 = arith.truncf %21 : vector<256x256xf32> to vector<256x256xbf16>
    %cst_9 = arith.constant dense<0.000000e+00> : vector<64x256xf32>
    %23 = tpu.matmul %2, %22, %cst_9 {dimension_numbers = #tpu.dot_dimension_numbers<[1], [1], [0], [0], [0, 0, 1, 0], [], []>} : vector<64x256xbf16>, vector<256x256xbf16>, vector<64x256xf32> -> vector<64x256xf32>
    %c0_10 = arith.constant 0 : index
    %c0_11 = arith.constant 0 : index
    %24 = vector.load %arg5[%c0_10, %c0_11] : memref<64x64xbf16, #tpu.memory_space<vmem>>, vector<64x64xbf16>
    %25 = arith.truncf %23 : vector<64x256xf32> to vector<64x256xbf16>
    %cst_12 = arith.constant dense<0.000000e+00> : vector<64x256xf32>
    %26 = tpu.matmul %24, %25, %cst_12 {dimension_numbers = #tpu.dot_dimension_numbers<[1], [0], [0], [1], [0, 0, 1, 1], [], []>} : vector<64x64xbf16>, vector<64x256xbf16>, vector<64x256xf32> -> vector<64x256xf32>
    %c0_13 = arith.constant 0 : index
    %c0_14 = arith.constant 0 : index
    %27 = vector.load %arg6[%c0_13, %c0_14] : memref<64x1xf32, #tpu.memory_space<vmem>>, vector<64x1xf32>
    %28 = vector.broadcast %27 : vector<64x1xf32> to vector<64x256xf32>
    %29 = arith.addf %26, %28 : vector<64x256xf32>
    %c0_15 = arith.constant 0 : index
    %c0_16 = arith.constant 0 : index
    %30 = memref.load %arg7[%c0_15, %c0_16] : memref<1x1xf32, #tpu.memory_space<smem>>
    %31 = vector.broadcast %30 : f32 to vector<64x256xf32>
    %32 = arith.mulf %31, %29 : vector<64x256xf32>
    %33 = arith.addf %32, %1 : vector<64x256xf32>
    %c0_17 = arith.constant 0 : index
    %c0_18 = arith.constant 0 : index
    %c0_19 = arith.constant 0 : index
    %34 = vector.load %arg8[%c0_17, %c0_18, %c0_19] : memref<1x64x256xf32, #tpu.memory_space<vmem>>, vector<1x64x256xf32>
    %35 = vector.shape_cast %34 : vector<1x64x256xf32> to vector<64x256xf32>
    %36 = vector.shape_cast %33 : vector<64x256xf32> to vector<1x64x256xf32>
    tpu.vector_store %arg8[%c0_17, %c0_18, %c0_19], %36 {strides = array<i32>} : memref<1x64x256xf32, #tpu.memory_space<vmem>>, vector<1x64x256xf32>,
    return
  }
  func.func @transform_0(%arg0: i32, %arg1: i32) -> (i32, i32, i32) {
    %c0_i32 = arith.constant 0 : i32
    %c0_i32_0 = arith.constant 0 : i32
    %c0_i32_1 = arith.constant 0 : i32
    return %arg0, %c0_i32, %c0_i32_0 : i32, i32, i32
  }
  func.func @transform_1(%arg0: i32, %arg1: i32) -> (i32, i32) {
    %c0_i32 = arith.constant 0 : i32
    %c0_i32_0 = arith.constant 0 : i32
    %c0_i32_1 = arith.constant 0 : i32
    return %c0_i32, %c0_i32_0 : i32, i32
  }
  func.func @transform_2(%arg0: i32, %arg1: i32) -> (i32, i32) {
    %c0_i32 = arith.constant 0 : i32
    %c0_i32_0 = arith.constant 0 : i32
    %c0_i32_1 = arith.constant 0 : i32
    return %c0_i32, %c0_i32_0 : i32, i32
  }
  func.func @transform_3(%arg0: i32, %arg1: i32) -> (i32, i32) {
    %c0_i32 = arith.constant 0 : i32
    %c0_i32_0 = arith.constant 0 : i32
    %c0_i32_1 = arith.constant 0 : i32
    return %c0_i32, %c0_i32_0 : i32, i32
  }
  func.func @transform_4(%arg0: i32, %arg1: i32) -> (i32, i32) {
    %c0_i32 = arith.constant 0 : i32
    %c0_i32_0 = arith.constant 0 : i32
    %c0_i32_1 = arith.constant 0 : i32
    return %c0_i32, %c0_i32_0 : i32, i32
  }
  func.func @transform_5(%arg0: i32, %arg1: i32) -> (i32, i32) {
    %c0_i32 = arith.constant 0 : i32
    %c0_i32_0 = arith.constant 0 : i32
    %c0_i32_1 = arith.constant 0 : i32
    return %c0_i32, %c0_i32_0 : i32, i32
  }
  func.func @transform_6(%arg0: i32, %arg1: i32) -> (i32, i32, i32) {
    %c0_i32 = arith.constant 0 : i32
    %c0_i32_0 = arith.constant 0 : i32
    return %arg0, %c0_i32, %arg1 : i32, i32, i32
  }
}

</mosaic_0001>

<llo_original>
// kernel: self_attn_dynamic.1
$region0: #{self_attn_dynamic.1}
  #allocation0 [shape = 'u32[]', space=smem, size = 0x4, offset = 0x4, fixed_abs, tag = 'smem constant byte address 0x4 - core index']
  #allocation1 [shape = 'u32[144,128]{1,0:T(1,128)}', space=vmem, size = 0x12000, scoped, tag = 'internal scratch']
  #allocation2 [shape = 'f32[1,1]{1,0:T(1,128)S(6)}', space=smem, size = 0x200, scoped, tag = 'scoped memory for self_attn_dynamic.1']
  %s0 = inlined_call_operand.vmem [shape: f32[2,64,256], index: 0, kind: input, shape index: {}]
  %s1 = inlined_call_operand.vmem [shape: bf16[64,64], index: 1, kind: input, shape index: {}]
  %s2 = inlined_call_operand.vmem [shape: f32[1,64], index: 2, kind: input, shape index: {}]
  %s3 = inlined_call_operand.vmem [shape: bf16[64,64], index: 3, kind: input, shape index: {}]
  %s4 = inlined_call_operand.vmem [shape: f32[64,1], index: 4, kind: input, shape index: {}]
  %s5 = inlined_call_operand.<no memory space> [shape: f32[1,1], index: 5, kind: input, shape index: {}]
  %s6 = inlined_call_operand.vmem [shape: f32[2,64,256], index: 6, kind: output, shape index: {}]
  %s7 = sld [smem:[#allocation0]]
  $region57: #{self_attn_dynamic.1} parent=0
    _
  %s9 = ssub.s32 1, %s7
  %s10 = scalar_select 0, %s9, %s7
  %11 = sst [smem:[#allocation2]] %s5
  loop: start=0, step=1, limit=4
  $region2: #{self_attn_dynamic.1} parent=0 // loop_pre_header
    _
  $region3: #{self_attn_dynamic.1} parent=0 // loop_header
    %s13 = sphi 0, %s17
    %p14 = scmp.ge.s32.totalorder %s13, 4
    %s20 = sphi 0, %s32
    %s21 = sphi 0, %s28
    %s22 = sphi 0, %s20
    %s23 = sphi 0, %s21
    %s24 = sphi 0, %s22
    %s25 = sphi 0, %s23
    %s35 = sphi 0, %s37
    %s38 = sphi 0, %s35
    %s39 = sphi 0, %s38
    %s55 = sphi 0, %s39
    %s59 = sphi 0, %s59
    %s61 = sphi 0, %s59
    %s62 = sphi 0, %s61
    %s76 = sphi 0, %s62
    %s80 = sphi 0, %s80
    %s82 = sphi 0, %s80
    %s83 = sphi 0, %s82
    %s97 = sphi 0, %s83
    %s101 = sphi 0, %s101
    %s103 = sphi 0, %s101
    %s104 = sphi 0, %s103
    %s118 = sphi 0, %s104
    %s122 = sphi 0, %s122
    %s124 = sphi 0, %s122
    %s125 = sphi 0, %s124
    %s139 = sphi 0, %s125
    %s143 = sphi 0, %s143
    %s145 = sphi 0, %s143
    %s146 = sphi 0, %s145
    %s160 = sphi 0, %s146
    %s168 = sphi 0, %s170
    %s171 = sphi 0, %s168
    %s172 = sphi 0, %s171
    %s188 = sphi 0, %s172
  $region4: #{self_attn_dynamic.1} parent=0 // loop_header_branch
    %16 = sbr.rel (%p14) target = $region8
  $region5: #{self_attn_dynamic.1} parent=0 // loop_body
    %s18 = ssub.s32 %s13, 1
    %s19 = ssub.s32 %s13, 2
    %s26 = sadd.s32 1, %s21
    %p27 = scmp.ge.s32.totalorder %s26, 1
    %s28 = scalar_select %p27, 0, %s26
    %s29 = sadd.s32 1, %s20
    %s30 = scalar_select %p27, %s29, %s20
    %p31 = scmp.ge.s32.totalorder %s30, 2
    %s32 = scalar_select %p31, 0, %s30
    %s33 = ssub.s32 %s20, %s32
    %p34 = scmp.eq.s32.totalorder %s33, 0
    %s36 = sadd.s32 %s35, 1
    %s37 = scalar_select %p34, %s35, %s36
    %p40 = pneg %p34
    %p41 = scmp.eq.s32.totalorder %s13, 1
    %p42 = por %p40, %p41
    %p43 = scmp.ne.s32.totalorder %s35, %s38
    %p44 = scmp.eq.s32.totalorder %s13, 0
    %p45 = por %p43, %p44
    %p46 = scmp.ne.s32.totalorder %s35, %s38
    %p47 = scmp.eq.s32.totalorder %s18, 1
    %p48 = por %p46, %p47
    %p49 = scmp.ne.s32.totalorder %s38, %s39
    %p50 = scmp.eq.s32.totalorder %s18, 0
    %p51 = por %p49, %p50
    %p52 = scmp.ne.s32.totalorder %s38, %s39
    %p53 = scmp.eq.s32.totalorder %s19, 1
    %p54 = por %p52, %p53
    %p56 = scmp.ne.s32.totalorder %s39, %s55
    %p57 = scmp.eq.s32.totalorder %s19, 0
    %p58 = por %p56, %p57
    %s60 = sadd.s32 %s59, 1
    %p63 = scmp.eq.s32.totalorder %s13, 1
    %p64 = scmp.ne.s32.totalorder %s59, %s61
    %p65 = scmp.eq.s32.totalorder %s13, 0
    %p66 = por %p64, %p65
    %p67 = scmp.ne.s32.totalorder %s59, %s61
    %p68 = scmp.eq.s32.totalorder %s18, 1
    %p69 = por %p67, %p68
    %p70 = scmp.ne.s32.totalorder %s61, %s62
    %p71 = scmp.eq.s32.totalorder %s18, 0
    %p72 = por %p70, %p71
    %p73 = scmp.ne.s32.totalorder %s61, %s62
    %p74 = scmp.eq.s32.totalorder %s19, 1
    %p75 = por %p73, %p74
    %p77 = scmp.ne.s32.totalorder %s62, %s76
    %p78 = scmp.eq.s32.totalorder %s19, 0
    %p79 = por %p77, %p78
    %s81 = sadd.s32 %s80, 1
    %p84 = scmp.eq.s32.totalorder %s13, 1
    %p85 = scmp.ne.s32.totalorder %s80, %s82
    %p86 = scmp.eq.s32.totalorder %s13, 0
    %p87 = por %p85, %p86
    %p88 = scmp.ne.s32.totalorder %s80, %s82
    %p89 = scmp.eq.s32.totalorder %s18, 1
    %p90 = por %p88, %p89
    %p91 = scmp.ne.s32.totalorder %s82, %s83
    %p92 = scmp.eq.s32.totalorder %s18, 0
    %p93 = por %p91, %p92
    %p94 = scmp.ne.s32.totalorder %s82, %s83
    %p95 = scmp.eq.s32.totalorder %s19, 1
    %p96 = por %p94, %p95
    %p98 = scmp.ne.s32.totalorder %s83, %s97
    %p99 = scmp.eq.s32.totalorder %s19, 0
    %p100 = por %p98, %p99
    %s102 = sadd.s32 %s101, 1
    %p105 = scmp.eq.s32.totalorder %s13, 1
    %p106 = scmp.ne.s32.totalorder %s101, %s103
    %p107 = scmp.eq.s32.totalorder %s13, 0
    %p108 = por %p106, %p107
    %p109 = scmp.ne.s32.totalorder %s101, %s103
    %p110 = scmp.eq.s32.totalorder %s18, 1
    %p111 = por %p109, %p110
    %p112 = scmp.ne.s32.totalorder %s103, %s104
    %p113 = scmp.eq.s32.totalorder %s18, 0
    %p114 = por %p112, %p113
    %p115 = scmp.ne.s32.totalorder %s103, %s104
    %p116 = scmp.eq.s32.totalorder %s19, 1
    %p117 = por %p115, %p116
    %p119 = scmp.ne.s32.totalorder %s104, %s118
    %p120 = scmp.eq.s32.totalorder %s19, 0
    %p121 = por %p119, %p120
    %s123 = sadd.s32 %s122, 1
    %p126 = scmp.eq.s32.totalorder %s13, 1
    %p127 = scmp.ne.s32.totalorder %s122, %s124
    %p128 = scmp.eq.s32.totalorder %s13, 0
    %p129 = por %p127, %p128
    %p130 = scmp.ne.s32.totalorder %s122, %s124
    %p131 = scmp.eq.s32.totalorder %s18, 1
    %p132 = por %p130, %p131
    %p133 = scmp.ne.s32.totalorder %s124, %s125
    %p134 = scmp.eq.s32.totalorder %s18, 0
    %p135 = por %p133, %p134
    %p136 = scmp.ne.s32.totalorder %s124, %s125
    %p137 = scmp.eq.s32.totalorder %s19, 1
    %p138 = por %p136, %p137
    %p140 = scmp.ne.s32.totalorder %s125, %s139
    %p141 = scmp.eq.s32.totalorder %s19, 0
    %p142 = por %p140, %p141
    %s144 = sadd.s32 %s143, 1
    %p147 = scmp.eq.s32.totalorder %s13, 1
    %p148 = scmp.ne.s32.totalorder %s143, %s145
    %p149 = scmp.eq.s32.totalorder %s13, 0
    %p150 = por %p148, %p149
    %p151 = scmp.ne.s32.totalorder %s143, %s145
    %p152 = scmp.eq.s32.totalorder %s18, 1
    %p153 = por %p151, %p152
    %p154 = scmp.ne.s32.totalorder %s145, %s146
    %p155 = scmp.eq.s32.totalorder %s18, 0
    %p156 = por %p154, %p155
    %p157 = scmp.ne.s32.totalorder %s145, %s146
    %p158 = scmp.eq.s32.totalorder %s19, 1
    %p159 = por %p157, %p158
    %p161 = scmp.ne.s32.totalorder %s146, %s160
    %p162 = scmp.eq.s32.totalorder %s19, 0
    %p163 = por %p161, %p162
    %s164 = ssub.s32 %s20, %s32
    %s165 = ssub.s32 %s21, %s28
    %s166 = sor.u32 %s164, %s165
    %p167 = scmp.eq.s32.totalorder %s166, 0
    %s169 = sadd.s32 %s168, 1
    %s170 = scalar_select %p167, %s168, %s169
    %p173 = pneg %p167
    %p174 = scmp.eq.s32.totalorder %s13, 1
    %p175 = por %p173, %p174
    %p176 = scmp.ne.s32.totalorder %s168, %s171
    %p177 = scmp.eq.s32.totalorder %s13, 0
    %p178 = por %p176, %p177
    %p179 = scmp.ne.s32.totalorder %s168, %s171
    %p180 = scmp.eq.s32.totalorder %s18, 1
    %p181 = por %p179, %p180
    %p182 = scmp.ne.s32.totalorder %s171, %s172
    %p183 = scmp.eq.s32.totalorder %s18, 0
    %p184 = por %p182, %p183
    %p185 = scmp.ne.s32.totalorder %s171, %s172
    %p186 = scmp.eq.s32.totalorder %s19, 1
    %p187 = por %p185, %p186
    %p189 = scmp.ne.s32.totalorder %s172, %s188
    %p190 = scmp.eq.s32.totalorder %s19, 0
    %p191 = por %p189, %p190
    %p192 = scmp.le.s32.totalorder 1, %s13
    %p193 = scmp.lt.s32.totalorder %s13, 3
    %p194 = pnand %p192, %p193
    %p195 = pneg %p194
    // Predicated region
    $region9: #{self_attn_dynamic.1} parent=5 // pred_check
      _
    $region10: #{self_attn_dynamic.1} parent=5 // pred_check_branch
      %197 = sbr.rel (%p194) target = $region12
    $region11: #{self_attn_dynamic.1} parent=5 // pred_region
      %s198 = ssub.s32 %s13, 1
      // Predicated region
      $region13: #{self_attn_dynamic.1} parent=11 // pred_check
        %p199 = pneg %p72
      $region14: #{self_attn_dynamic.1} parent=11 // pred_check_branch
        %201 = sbr.rel (%p199) target = $region16
      $region15: #{self_attn_dynamic.1} parent=11 // pred_region
        _
      $region16: #{self_attn_dynamic.1} parent=11 // pred_fallthru
        _
      // Predicated region
      $region17: #{self_attn_dynamic.1} parent=11 // pred_check
        %p202 = pneg %p93
      $region18: #{self_attn_dynamic.1} parent=11 // pred_check_branch
        %204 = sbr.rel (%p202) target = $region20
      $region19: #{self_attn_dynamic.1} parent=11 // pred_region
        _
      $region20: #{self_attn_dynamic.1} parent=11 // pred_fallthru
        _
      // Predicated region
      $region21: #{self_attn_dynamic.1} parent=11 // pred_check
        %p205 = pneg %p114
      $region22: #{self_attn_dynamic.1} parent=11 // pred_check_branch
        %207 = sbr.rel (%p205) target = $region24
      $region23: #{self_attn_dynamic.1} parent=11 // pred_region
        _
      $region24: #{self_attn_dynamic.1} parent=11 // pred_fallthru
        _
      // Predicated region
      $region25: #{self_attn_dynamic.1} parent=11 // pred_check
        %p208 = pneg %p135
      $region26: #{self_attn_dynamic.1} parent=11 // pred_check_branch
        %210 = sbr.rel (%p208) target = $region28
      $region27: #{self_attn_dynamic.1} parent=11 // pred_region
        _
      $region28: #{self_attn_dynamic.1} parent=11 // pred_fallthru
        _
      // Predicated region
      $region29: #{self_attn_dynamic.1} parent=11 // pred_check
        %p211 = pneg %p156
      $region30: #{self_attn_dynamic.1} parent=11 // pred_check_branch
        %213 = sbr.rel (%p211) target = $region32
      $region31: #{self_attn_dynamic.1} parent=11 // pred_region
        _
      $region32: #{self_attn_dynamic.1} parent=11 // pred_fallthru
        _
    $region12: #{self_attn_dynamic.1} parent=5 // pred_fallthru
      _
    %p214 = scmp.lt.s32.totalorder %s13, 2
    // Predicated region
    $region33: #{self_attn_dynamic.1} parent=5 // pred_check
      %p215 = pneg %p214
    $region34: #{self_attn_dynamic.1} parent=5 // pred_check_branch
      %217 = sbr.rel (%p215) target = $region36
    $region35: #{self_attn_dynamic.1} parent=5 // pred_region
      // Predicated region
      $region37: #{self_attn_dynamic.1} parent=35 // pred_check
        %p218 = pneg %p45
      $region38: #{self_attn_dynamic.1} parent=35 // pred_check_branch
        %220 = sbr.rel (%p218) target = $region40
      $region39: #{self_attn_dynamic.1} parent=35 // pred_region
        %p221 = scmp.lt.s32.totalorder %s20, 1
        %s222 = scalar_select %p221, %s20, 1
        %s223 = smul.addr %s222, 16
        %s224 = smul.addr %s223, 8
        %s225 = scalar_lea.vmem %s0, %s224
      $region40: #{self_attn_dynamic.1} parent=35 // pred_fallthru
        _
    $region36: #{self_attn_dynamic.1} parent=5 // pred_fallthru
      _
    %p226 = scmp.le.s32.totalorder 1, %s13
    %p227 = scmp.lt.s32.totalorder %s13, 3
    %p228 = pnand %p226, %p227
    %p229 = pneg %p228
    // Predicated region
    $region41: #{self_attn_dynamic.1} parent=5 // pred_check
      _
    $region42: #{self_attn_dynamic.1} parent=5 // pred_check_branch
      %231 = sbr.rel (%p228) target = $region44
    $region43: #{self_attn_dynamic.1} parent=5 // pred_region
      %s232 = ssub.s32 %s13, 1
      %p233 = scmp.lt.s32.totalorder %s22, 1
      %s234 = scalar_select %p233, %s22, 1
      %s235 = smul.addr %s234, 16
      %s236 = smul.addr %s235, 8
      %s237 = scalar_lea.vmem %s0, %s236
      %p238 = pneg %p51
      %p239 = pneg %p48
      %p240 = pneg %p72
      %p241 = pneg %p69
      %p242 = pneg %p93
      %p243 = pneg %p90
      %p244 = pneg %p114
      %p245 = pneg %p111
      %p246 = pneg %p135
      %p247 = pneg %p132
      %p248 = pneg %p156
      %p249 = pneg %p153
      %p250 = pneg %p184
      %p251 = pneg %p181
      %s252 = smul.u32 2, %s23
      %p253 = scmp.lt.s32.totalorder %s22, 1
      %s254 = scalar_select %p253, %s22, 1
      %p255 = scmp.lt.s32.totalorder %s252, 1
      %s256 = scalar_select %p255, %s252, 1
      %s257 = smul.addr %s254, 16
      %s258 = sadd.s32 %s256, %s257
      %s259 = smul.addr %s258, 8
      %s260 = scalar_lea.vmem %s6, %s259
      %p261 = scmp.lt.s32.totalorder %s22, 1
      %s262 = scalar_select %p261, %s22, 1
      %s263 = smul.addr %s262, 16
      %s264 = smul.addr %s263, 8
      %s265 = scalar_lea.vmem %s0, %s264
      %s266 = smul.u32 2, %s23
      %p267 = scmp.lt.s32.totalorder %s22, 1
      %s268 = scalar_select %p267, %s22, 1
      %p269 = scmp.lt.s32.totalorder %s266, 1
      %s270 = scalar_select %p269, %s266, 1
      %s271 = smul.addr %s268, 16
      %s272 = sadd.s32 %s270, %s271
      %s273 = smul.addr %s272, 8
      %s274 = scalar_lea.vmem %s6, %s273
      %s275 = smul.u32 2, %s23
      %v277 = vld [vmem:[%s265] sm:$0xff]
      %v278 = vld [vmem:[%s265 + $0x8] sm:$0xff]
      %v279 = vld [vmem:[%s265 + $0x10] sm:$0xff]
      %v280 = vld [vmem:[%s265 + $0x18] sm:$0xff]
      %v281 = vld [vmem:[%s265 + $0x20] sm:$0xff]
      %v282 = vld [vmem:[%s265 + $0x28] sm:$0xff]
      %v283 = vld [vmem:[%s265 + $0x30] sm:$0xff]
      %v284 = vld [vmem:[%s265 + $0x38] sm:$0xff]
      %v285 = vld [vmem:[%s265 + $0x40] sm:$0xff]
      %v286 = vld [vmem:[%s265 + $0x48] sm:$0xff]
      %v287 = vld [vmem:[%s265 + $0x50] sm:$0xff]
      %v288 = vld [vmem:[%s265 + $0x58] sm:$0xff]
      %v289 = vld [vmem:[%s265 + $0x60] sm:$0xff]
      %v290 = vld [vmem:[%s265 + $0x68] sm:$0xff]
      %v291 = vld [vmem:[%s265 + $0x70] sm:$0xff]
      %v292 = vld [vmem:[%s265 + $0x78] sm:$0xff]
      %v293 = vpack.c.bf16 %v279, %v277
      %v294 = vpack.c.bf16 %v280, %v278
      %v295 = vpack.c.bf16 %v283, %v281
      %v296 = vpack.c.bf16 %v284, %v282
      %v297 = vpack.c.bf16 %v287, %v285
      %v298 = vpack.c.bf16 %v288, %v286
      %v299 = vpack.c.bf16 %v291, %v289
      %v300 = vpack.c.bf16 %v292, %v290
      %301 = vxpose.xlu0.b32.start [1/16] %v277, 128
      %302 = vxpose.xlu0.b32.cont [2/16] %v279, 128
      %303 = vxpose.xlu0.b32.cont [3/16] %v281, 128
      %304 = vxpose.xlu0.b32.cont [4/16] %v283, 128
      %305 = vxpose.xlu0.b32.cont [5/16] %v285, 128
      %306 = vxpose.xlu0.b32.cont [6/16] %v287, 128
      %307 = vxpose.xlu0.b32.cont [7/16] %v289, 128
      %308 = vxpose.xlu0.b32.cont [8/16] %v291, 128
      %309 = vxpose.xlu0.b32.cont [9/16] 0.0, 128
      %310 = vxpose.xlu0.b32.cont [10/16] 0.0, 128
      %311 = vxpose.xlu0.b32.cont [11/16] 0.0, 128
      %312 = vxpose.xlu0.b32.cont [12/16] 0.0, 128
      %313 = vxpose.xlu0.b32.cont [13/16] 0.0, 128
      %314 = vxpose.xlu0.b32.cont [14/16] 0.0, 128
      %315 = vxpose.xlu0.b32.cont [15/16] 0.0, 128
      %316 = vxpose.xlu0.b32.end [16/16] 0.0, 128
      %v317 = vpop.trf.xlu0
      %v318 = vpop.trf.xlu0
      %v319 = vpop.trf.xlu0
      %v320 = vpop.trf.xlu0
      %v321 = vpop.trf.xlu0
      %v322 = vpop.trf.xlu0
      %v323 = vpop.trf.xlu0
      %v324 = vpop.trf.xlu0
      %v325 = vpop.trf.xlu0
      %v326 = vpop.trf.xlu0
      %v327 = vpop.trf.xlu0
      %v328 = vpop.trf.xlu0
      %v329 = vpop.trf.xlu0
      %v330 = vpop.trf.xlu0
      %v331 = vpop.trf.xlu0
      %v332 = vpop.trf.xlu0
      %333 = vxpose.xlu0.b32.start [1/16] %v278, 128
      %334 = vxpose.xlu0.b32.cont [2/16] %v280, 128
      %335 = vxpose.xlu0.b32.cont [3/16] %v282, 128
      %336 = vxpose.xlu0.b32.cont [4/16] %v284, 128
      %337 = vxpose.xlu0.b32.cont [5/16] %v286, 128
      %338 = vxpose.xlu0.b32.cont [6/16] %v288, 128
      %339 = vxpose.xlu0.b32.cont [7/16] %v290, 128
      %340 = vxpose.xlu0.b32.cont [8/16] %v292, 128
      %341 = vxpose.xlu0.b32.cont [9/16] 0.0, 128
      %342 = vxpose.xlu0.b32.cont [10/16] 0.0, 128
      %343 = vxpose.xlu0.b32.cont [11/16] 0.0, 128
      %344 = vxpose.xlu0.b32.cont [12/16] 0.0, 128
      %345 = vxpose.xlu0.b32.cont [13/16] 0.0, 128
      %346 = vxpose.xlu0.b32.cont [14/16] 0.0, 128
      %347 = vxpose.xlu0.b32.cont [15/16] 0.0, 128
      %348 = vxpose.xlu0.b32.end [16/16] 0.0, 128
      %v349 = vpop.trf.xlu0
      %v350 = vpop.trf.xlu0
      %v351 = vpop.trf.xlu0
      %v352 = vpop.trf.xlu0
      %v353 = vpop.trf.xlu0
      %v354 = vpop.trf.xlu0
      %v355 = vpop.trf.xlu0
      %v356 = vpop.trf.xlu0
      %v357 = vpop.trf.xlu0
      %v358 = vpop.trf.xlu0
      %v359 = vpop.trf.xlu0
      %v360 = vpop.trf.xlu0
      %v361 = vpop.trf.xlu0
      %v362 = vpop.trf.xlu0
      %v363 = vpop.trf.xlu0
      %v364 = vpop.trf.xlu0
      %v365 = vpack.c.bf16 %v318, %v317
      %v366 = vpack.c.bf16 %v320, %v319
      %v367 = vpack.c.bf16 %v322, %v321
      %v368 = vpack.c.bf16 %v324, %v323
      %v369 = vpack.c.bf16 %v326, %v325
      %v370 = vpack.c.bf16 %v328, %v327
      %v371 = vpack.c.bf16 %v330, %v329
      %v372 = vpack.c.bf16 %v332, %v331
      %v373 = vpack.c.bf16 %v350, %v349
      %v374 = vpack.c.bf16 %v352, %v351
      %v375 = vpack.c.bf16 %v354, %v353
      %v376 = vpack.c.bf16 %v356, %v355
      %v377 = vpack.c.bf16 %v358, %v357
      %v378 = vpack.c.bf16 %v360, %v359
      %v379 = vpack.c.bf16 %v362, %v361
      %v380 = vpack.c.bf16 %v364, %v363
      %v381 = vld [vmem:[%s1] sm:$0xf]
      %v382 = vld [vmem:[%s1 + $0x4] sm:$0xf]
      %v383 = vld [vmem:[%s1 + $0x8] sm:$0xf]
      %v384 = vld [vmem:[%s1 + $0xc] sm:$0xf]
      %v385 = vld [vmem:[%s1 + $0x10] sm:$0xf]
      %v386 = vld [vmem:[%s1 + $0x14] sm:$0xf]
      %v387 = vld [vmem:[%s1 + $0x18] sm:$0xf]
      %v388 = vld [vmem:[%s1 + $0x1c] sm:$0xf]
      %v389 = vld [vmem:[%s2] sm:$0x1]
      %v391 = vlaneseq
      %v392 = vshrl.u32 %v391, 7
      %v393 = vsub.s32 0, %v392
      %v394 = vrot.slane %v389, %v393
      %v404 = vunpack.c.l.b16 %v381
      %v405 = vunpack.c.l.b16 %v382
      %v406 = vunpack.c.l.b16 %v383
      %v407 = vunpack.c.l.b16 %v384
      %v408 = vunpack.c.l.b16 %v385
      %v409 = vunpack.c.l.b16 %v386
      %v410 = vunpack.c.l.b16 %v387
      %v411 = vunpack.c.l.b16 %v388
      %v412 = vpack.c.b16 %v405, %v404
      %v413 = vpack.c.b16 %v407, %v406
      %v414 = vpack.c.b16 %v409, %v408
      %v415 = vpack.c.b16 %v411, %v410
      %vm420 = vcmask 523264
      %v422 = vsel %vm420, %v365, 0
      %v425 = vsel %vm420, %v366, 0
      %v428 = vsel %vm420, %v367, 0
      %v431 = vsel %vm420, %v368, 0
      %v434 = vsel %vm420, %v369, 0
      %v437 = vsel %vm420, %v370, 0
      %v440 = vsel %vm420, %v371, 0
      %v443 = vsel %vm420, %v372, 0
      %v446 = vsel %vm420, %v373, 0
      %v449 = vsel %vm420, %v374, 0
      %v452 = vsel %vm420, %v375, 0
      %v455 = vsel %vm420, %v376, 0
      %v458 = vsel %vm420, %v377, 0
      %v461 = vsel %vm420, %v378, 0
      %v464 = vsel %vm420, %v379, 0
      %v467 = vsel %vm420, %v380, 0
      %469 = vmatprep.subr.bf16.mxu0 0
      %470 = vmatpush1.bf16.msra.mxu0 0
      %471 = vmatprep.subr.bf16.mxu0 0
      %472 = vmatpush1.bf16.msra.mxu0 0
      %473 = vmatprep.subr.bf16.mxu0 0
      %474 = vmatpush1.bf16.msra.mxu0 0
      %475 = vmatprep.subr.bf16.mxu0 0
      %476 = vmatpush1.bf16.msra.mxu0 0
      %477 = vmatprep.subr.bf16.mxu0 0
      %478 = vmatpush1.bf16.msra.mxu0 %v415
      %479 = vmatprep.subr.bf16.mxu0 0
      %480 = vmatpush1.bf16.msra.mxu0 %v414
      %481 = vmatprep.subr.bf16.mxu0 0
      %482 = vmatpush1.bf16.msra.mxu0 %v413
      %483 = vmatprep.subr.bf16.mxu0 0
      %484 = vmatpush1.bf16.msra.mxu0 %v412
      %485 = vmatprep.subr.bf16.mxu0 0
      %486 = vmatpush2.bf16.msra.mxu0 0
      %487 = vmatprep.subr.bf16.mxu0 0
      %488 = vmatpush2.bf16.msra.mxu0 0
      %489 = vmatprep.subr.bf16.mxu0 0
      %490 = vmatpush2.bf16.msra.mxu0 0
      %491 = vmatprep.subr.bf16.mxu0 0
      %492 = vmatpush2.bf16.msra.mxu0 0
      %493 = vmatprep.subr.bf16.mxu0 0
      %494 = vmatpush2.bf16.msra.mxu0 0
      %495 = vmatprep.subr.bf16.mxu0 0
      %496 = vmatpush2.bf16.msra.mxu0 0
      %497 = vmatprep.subr.bf16.mxu0 0
      %498 = vmatpush2.bf16.msra.mxu0 0
      %499 = vmatprep.subr.bf16.mxu0 0
      %500 = vmatpush2.bf16.msra.mxu0 0
      %501 = vmatprep.mubr.bf16.mxu0 0
      %502 = vmatmul.mubr.bf16.gmra.mxu0 %v422
      %v503 = vpop.f32.mrf.mxu0
      %v504 = vadd.f32 %v394, %v503
      %v505 = vpop.f32.mrf.mxu0
      %v506 = vpop.f32.mrf.mxu0
      %v507 = vadd.f32 %v394, %v506
      %v508 = vpop.f32.mrf.mxu0
      %509 = vmatprep.mubr.bf16.mxu0 0
      %510 = vmatmul.mubr.bf16.gmra.mxu0 %v425
      %v511 = vpop.f32.mrf.mxu0
      %v512 = vadd.f32 %v394, %v511
      %v513 = vpop.f32.mrf.mxu0
      %v514 = vpop.f32.mrf.mxu0
      %v515 = vadd.f32 %v394, %v514
      %v516 = vpop.f32.mrf.mxu0
      %517 = vmatprep.mubr.bf16.mxu0 0
      %518 = vmatmul.mubr.bf16.gmra.mxu0 %v428
      %v519 = vpop.f32.mrf.mxu0
      %v520 = vadd.f32 %v394, %v519
      %v521 = vpop.f32.mrf.mxu0
      %v522 = vpop.f32.mrf.mxu0
      %v523 = vadd.f32 %v394, %v522
      %v524 = vpop.f32.mrf.mxu0
      %525 = vmatprep.mubr.bf16.mxu0 0
      %526 = vmatmul.mubr.bf16.gmra.mxu0 %v431
      %v527 = vpop.f32.mrf.mxu0
      %v528 = vadd.f32 %v394, %v527
      %v529 = vpop.f32.mrf.mxu0
      %v530 = vpop.f32.mrf.mxu0
      %v531 = vadd.f32 %v394, %v530
      %v532 = vpop.f32.mrf.mxu0
      %533 = vmatprep.mubr.bf16.mxu0 0
      %534 = vmatmul.mubr.bf16.gmra.mxu0 %v434
      %v535 = vpop.f32.mrf.mxu0
      %v536 = vadd.f32 %v394, %v535
      %v537 = vpop.f32.mrf.mxu0
      %v538 = vpop.f32.mrf.mxu0
      %v539 = vadd.f32 %v394, %v538
      %v540 = vpop.f32.mrf.mxu0
      %541 = vmatprep.mubr.bf16.mxu0 0
      %542 = vmatmul.mubr.bf16.gmra.mxu0 %v437
      %v543 = vpop.f32.mrf.mxu0
      %v544 = vadd.f32 %v394, %v543
      %v545 = vpop.f32.mrf.mxu0
      %v546 = vpop.f32.mrf.mxu0
      %v547 = vadd.f32 %v394, %v546
      %v548 = vpop.f32.mrf.mxu0
      %549 = vmatprep.mubr.bf16.mxu0 0
      %550 = vmatmul.mubr.bf16.gmra.mxu0 %v440
      %v551 = vpop.f32.mrf.mxu0
      %v552 = vadd.f32 %v394, %v551
      %v553 = vpop.f32.mrf.mxu0
      %v554 = vpop.f32.mrf.mxu0
      %v555 = vadd.f32 %v394, %v554
      %v556 = vpop.f32.mrf.mxu0
      %557 = vmatprep.mubr.bf16.mxu0 0
      %558 = vmatmul.mubr.bf16.gmra.mxu0 %v443
      %v559 = vpop.f32.mrf.mxu0
      %v560 = vadd.f32 %v394, %v559
      %v561 = vpop.f32.mrf.mxu0
      %v562 = vpop.f32.mrf.mxu0
      %v563 = vadd.f32 %v394, %v562
      %v564 = vpop.f32.mrf.mxu0
      %565 = vmatprep.mubr.bf16.mxu0 0
      %566 = vmatmul.mubr.bf16.gmra.mxu0 %v446
      %v567 = vpop.f32.mrf.mxu0
      %v568 = vadd.f32 %v394, %v567
      %v569 = vpop.f32.mrf.mxu0
      %v570 = vpop.f32.mrf.mxu0
      %v571 = vadd.f32 %v394, %v570
      %v572 = vpop.f32.mrf.mxu0
      %573 = vmatprep.mubr.bf16.mxu0 0
      %574 = vmatmul.mubr.bf16.gmra.mxu0 %v449
      %v575 = vpop.f32.mrf.mxu0
      %v576 = vadd.f32 %v394, %v575
      %v577 = vpop.f32.mrf.mxu0
      %v578 = vpop.f32.mrf.mxu0
      %v579 = vadd.f32 %v394, %v578
      %v580 = vpop.f32.mrf.mxu0
      %581 = vmatprep.mubr.bf16.mxu0 0
      %582 = vmatmul.mubr.bf16.gmra.mxu0 %v452
      %v583 = vpop.f32.mrf.mxu0
      %v584 = vadd.f32 %v394, %v583
      %v585 = vpop.f32.mrf.mxu0
      %v586 = vpop.f32.mrf.mxu0
      %v587 = vadd.f32 %v394, %v586
      %v588 = vpop.f32.mrf.mxu0
      %589 = vmatprep.mubr.bf16.mxu0 0
      %590 = vmatmul.mubr.bf16.gmra.mxu0 %v455
      %v591 = vpop.f32.mrf.mxu0
      %v592 = vadd.f32 %v394, %v591
      %v593 = vpop.f32.mrf.mxu0
      %v594 = vpop.f32.mrf.mxu0
      %v595 = vadd.f32 %v394, %v594
      %v596 = vpop.f32.mrf.mxu0
      %597 = vmatprep.mubr.bf16.mxu0 0
      %598 = vmatmul.mubr.bf16.gmra.mxu0 %v458
      %v599 = vpop.f32.mrf.mxu0
      %v600 = vadd.f32 %v394, %v599
      %v601 = vpop.f32.mrf.mxu0
      %v602 = vpop.f32.mrf.mxu0
      %v603 = vadd.f32 %v394, %v602
      %v604 = vpop.f32.mrf.mxu0
      %605 = vmatprep.mubr.bf16.mxu0 0
      %606 = vmatmul.mubr.bf16.gmra.mxu0 %v461
      %v607 = vpop.f32.mrf.mxu0
      %v608 = vadd.f32 %v394, %v607
      %v609 = vpop.f32.mrf.mxu0
      %v610 = vpop.f32.mrf.mxu0
      %v611 = vadd.f32 %v394, %v610
      %v612 = vpop.f32.mrf.mxu0
      %613 = vmatprep.mubr.bf16.mxu0 0
      %614 = vmatmul.mubr.bf16.gmra.mxu0 %v464
      %v615 = vpop.f32.mrf.mxu0
      %v616 = vadd.f32 %v394, %v615
      %v617 = vpop.f32.mrf.mxu0
      %v618 = vpop.f32.mrf.mxu0
      %v619 = vadd.f32 %v394, %v618
      %v620 = vpop.f32.mrf.mxu0
      %621 = vmatprep.mubr.bf16.mxu0 0
      %622 = vmatmul.mubr.bf16.gmra.mxu0 %v467
      %v623 = vpop.f32.mrf.mxu0
      %v624 = vadd.f32 %v394, %v623
      %v625 = vpop.f32.mrf.mxu0
      %v626 = vpop.f32.mrf.mxu0
      %v627 = vadd.f32 %v394, %v626
      %v628 = vpop.f32.mrf.mxu0
      %629 = vdwg.mxu0
      %v630 = vpack.c.bf16 %v507, %v504
      %v631 = vpack.c.bf16 %v515, %v512
      %v632 = vpack.c.bf16 %v523, %v520
      %v633 = vpack.c.bf16 %v531, %v528
      %v634 = vpack.c.bf16 %v539, %v536
      %v635 = vpack.c.bf16 %v547, %v544
      %v636 = vpack.c.bf16 %v555, %v552
      %v637 = vpack.c.bf16 %v563, %v560
      %v638 = vpack.c.bf16 %v571, %v568
      %v639 = vpack.c.bf16 %v579, %v576
      %v640 = vpack.c.bf16 %v587, %v584
      %v641 = vpack.c.bf16 %v595, %v592
      %v642 = vpack.c.bf16 %v603, %v600
      %v643 = vpack.c.bf16 %v611, %v608
      %v644 = vpack.c.bf16 %v619, %v616
      %v645 = vpack.c.bf16 %v627, %v624
      %v647 = vsel %vm420, %v630, 0
      %v650 = vsel %vm420, %v631, 0
      %v653 = vsel %vm420, %v632, 0
      %v656 = vsel %vm420, %v633, 0
      %v659 = vsel %vm420, %v634, 0
      %v662 = vsel %vm420, %v635, 0
      %v665 = vsel %vm420, %v636, 0
      %v668 = vsel %vm420, %v637, 0
      %v671 = vsel %vm420, %v638, 0
      %v674 = vsel %vm420, %v639, 0
      %v677 = vsel %vm420, %v640, 0
      %v680 = vsel %vm420, %v641, 0
      %v683 = vsel %vm420, %v642, 0
      %v686 = vsel %vm420, %v643, 0
      %v689 = vsel %vm420, %v644, 0
      %v692 = vsel %vm420, %v645, 0
      %694 = vmatprep.subr.bf16.mxu0 0
      %695 = vmatpush1.bf16.msra.mxu0 0
      %696 = vmatprep.subr.bf16.mxu0 0
      %697 = vmatpush1.bf16.msra.mxu0 0
      %698 = vmatprep.subr.bf16.mxu0 0
      %699 = vmatpush1.bf16.msra.mxu0 0
      %700 = vmatprep.subr.bf16.mxu0 0
      %701 = vmatpush1.bf16.msra.mxu0 0
      %702 = vmatprep.subr.bf16.mxu0 %v300
      %703 = vmatpush1.bf16.msra.mxu0 %v299
      %704 = vmatprep.subr.bf16.mxu0 %v298
      %705 = vmatpush1.bf16.msra.mxu0 %v297
      %706 = vmatprep.subr.bf16.mxu0 %v296
      %707 = vmatpush1.bf16.msra.mxu0 %v295
      %708 = vmatprep.subr.bf16.mxu0 %v294
      %709 = vmatpush1.bf16.msra.mxu0 %v293
      %710 = vmatprep.subr.bf16.mxu0 0
      %711 = vmatpush2.bf16.msra.mxu0 0
      %712 = vmatprep.subr.bf16.mxu0 0
      %713 = vmatpush2.bf16.msra.mxu0 0
      %714 = vmatprep.subr.bf16.mxu0 0
      %715 = vmatpush2.bf16.msra.mxu0 0
      %716 = vmatprep.subr.bf16.mxu0 0
      %717 = vmatpush2.bf16.msra.mxu0 0
      %718 = vmatprep.subr.bf16.mxu0 0
      %719 = vmatpush2.bf16.msra.mxu0 0
      %720 = vmatprep.subr.bf16.mxu0 0
      %721 = vmatpush2.bf16.msra.mxu0 0
      %722 = vmatprep.subr.bf16.mxu0 0
      %723 = vmatpush2.bf16.msra.mxu0 0
      %724 = vmatprep.subr.bf16.mxu0 0
      %725 = vmatpush2.bf16.msra.mxu0 0
      %726 = vmatprep.mubr.bf16.mxu0 0
      %727 = vmatmul.mubr.bf16.gmra.mxu0 %v647
      %v728 = vpop.f32.mrf.mxu0
      %v729 = vadd.f32 0.0, %v728
      %v730 = vpop.f32.mrf.mxu0
      %v731 = vadd.f32 0.0, %v730
      %v732 = vpop.f32.mrf.mxu0
      %v733 = vadd.f32 0.0, %v732
      %v734 = vpop.f32.mrf.mxu0
      %v735 = vadd.f32 0.0, %v734
      %736 = vmatprep.mubr.bf16.mxu0 0
      %737 = vmatmul.mubr.bf16.gmra.mxu0 %v650
      %v738 = vpop.f32.mrf.mxu0
      %v739 = vadd.f32 0.0, %v738
      %v740 = vpop.f32.mrf.mxu0
      %v741 = vadd.f32 0.0, %v740
      %v742 = vpop.f32.mrf.mxu0
      %v743 = vadd.f32 0.0, %v742
      %v744 = vpop.f32.mrf.mxu0
      %v745 = vadd.f32 0.0, %v744
      %746 = vmatprep.mubr.bf16.mxu0 0
      %747 = vmatmul.mubr.bf16.gmra.mxu0 %v653
      %v748 = vpop.f32.mrf.mxu0
      %v749 = vadd.f32 0.0, %v748
      %v750 = vpop.f32.mrf.mxu0
      %v751 = vadd.f32 0.0, %v750
      %v752 = vpop.f32.mrf.mxu0
      %v753 = vadd.f32 0.0, %v752
      %v754 = vpop.f32.mrf.mxu0
      %v755 = vadd.f32 0.0, %v754
      %756 = vmatprep.mubr.bf16.mxu0 0
      %757 = vmatmul.mubr.bf16.gmra.mxu0 %v656
      %v758 = vpop.f32.mrf.mxu0
      %v759 = vadd.f32 0.0, %v758
      %v760 = vpop.f32.mrf.mxu0
      %v761 = vadd.f32 0.0, %v760
      %v762 = vpop.f32.mrf.mxu0
      %v763 = vadd.f32 0.0, %v762
      %v764 = vpop.f32.mrf.mxu0
      %v765 = vadd.f32 0.0, %v764
      %766 = vmatprep.mubr.bf16.mxu0 0
      %767 = vmatmul.mubr.bf16.gmra.mxu0 %v659
      %v768 = vpop.f32.mrf.mxu0
      %v769 = vadd.f32 0.0, %v768
      %v770 = vpop.f32.mrf.mxu0
      %v771 = vadd.f32 0.0, %v770
      %v772 = vpop.f32.mrf.mxu0
      %v773 = vadd.f32 0.0, %v772
      %v774 = vpop.f32.mrf.mxu0
      %v775 = vadd.f32 0.0, %v774
      %776 = vmatprep.mubr.bf16.mxu0 0
      %777 = vmatmul.mubr.bf16.gmra.mxu0 %v662
      %v778 = vpop.f32.mrf.mxu0
      %v779 = vadd.f32 0.0, %v778
      %v780 = vpop.f32.mrf.mxu0
      %v781 = vadd.f32 0.0, %v780
      %v782 = vpop.f32.mrf.mxu0
      %v783 = vadd.f32 0.0, %v782
      %v784 = vpop.f32.mrf.mxu0
      %v785 = vadd.f32 0.0, %v784
      %786 = vmatprep.mubr.bf16.mxu0 0
      %787 = vmatmul.mubr.bf16.gmra.mxu0 %v665
      %v788 = vpop.f32.mrf.mxu0
      %v789 = vadd.f32 0.0, %v788
      %v790 = vpop.f32.mrf.mxu0
      %v791 = vadd.f32 0.0, %v790
      %v792 = vpop.f32.mrf.mxu0
      %v793 = vadd.f32 0.0, %v792
      %v794 = vpop.f32.mrf.mxu0
      %v795 = vadd.f32 0.0, %v794
      %796 = vmatprep.mubr.bf16.mxu0 0
      %797 = vmatmul.mubr.bf16.gmra.mxu0 %v668
      %v798 = vpop.f32.mrf.mxu0
      %v799 = vadd.f32 0.0, %v798
      %v800 = vpop.f32.mrf.mxu0
      %v801 = vadd.f32 0.0, %v800
      %v802 = vpop.f32.mrf.mxu0
      %v803 = vadd.f32 0.0, %v802
      %v804 = vpop.f32.mrf.mxu0
      %v805 = vadd.f32 0.0, %v804
      %806 = vmatprep.mubr.bf16.mxu0 0
      %807 = vmatmul.mubr.bf16.gmra.mxu0 %v671
      %v808 = vpop.f32.mrf.mxu0
      %v809 = vadd.f32 0.0, %v808
      %v810 = vpop.f32.mrf.mxu0
      %v811 = vadd.f32 0.0, %v810
      %v812 = vpop.f32.mrf.mxu0
      %v813 = vadd.f32 0.0, %v812
      %v814 = vpop.f32.mrf.mxu0
      %v815 = vadd.f32 0.0, %v814
      %816 = vmatprep.mubr.bf16.mxu0 0
      %817 = vmatmul.mubr.bf16.gmra.mxu0 %v674
      %v818 = vpop.f32.mrf.mxu0
      %v819 = vadd.f32 0.0, %v818
      %v820 = vpop.f32.mrf.mxu0
      %v821 = vadd.f32 0.0, %v820
      %v822 = vpop.f32.mrf.mxu0
      %v823 = vadd.f32 0.0, %v822
      %v824 = vpop.f32.mrf.mxu0
      %v825 = vadd.f32 0.0, %v824
      %826 = vmatprep.mubr.bf16.mxu0 0
      %827 = vmatmul.mubr.bf16.gmra.mxu0 %v677
      %v828 = vpop.f32.mrf.mxu0
      %v829 = vadd.f32 0.0, %v828
      %v830 = vpop.f32.mrf.mxu0
      %v831 = vadd.f32 0.0, %v830
      %v832 = vpop.f32.mrf.mxu0
      %v833 = vadd.f32 0.0, %v832
      %v834 = vpop.f32.mrf.mxu0
      %v835 = vadd.f32 0.0, %v834
      %836 = vmatprep.mubr.bf16.mxu0 0
      %837 = vmatmul.mubr.bf16.gmra.mxu0 %v680
      %v838 = vpop.f32.mrf.mxu0
      %v839 = vadd.f32 0.0, %v838
      %v840 = vpop.f32.mrf.mxu0
      %v841 = vadd.f32 0.0, %v840
      %v842 = vpop.f32.mrf.mxu0
      %v843 = vadd.f32 0.0, %v842
      %v844 = vpop.f32.mrf.mxu0
      %v845 = vadd.f32 0.0, %v844
      %846 = vmatprep.mubr.bf16.mxu0 0
      %847 = vmatmul.mubr.bf16.gmra.mxu0 %v683
      %v848 = vpop.f32.mrf.mxu0
      %v849 = vadd.f32 0.0, %v848
      %v850 = vpop.f32.mrf.mxu0
      %v851 = vadd.f32 0.0, %v850
      %v852 = vpop.f32.mrf.mxu0
      %v853 = vadd.f32 0.0, %v852
      %v854 = vpop.f32.mrf.mxu0
      %v855 = vadd.f32 0.0, %v854
      %856 = vmatprep.mubr.bf16.mxu0 0
      %857 = vmatmul.mubr.bf16.gmra.mxu0 %v686
      %v858 = vpop.f32.mrf.mxu0
      %v859 = vadd.f32 0.0, %v858
      %v860 = vpop.f32.mrf.mxu0
      %v861 = vadd.f32 0.0, %v860
      %v862 = vpop.f32.mrf.mxu0
      %v863 = vadd.f32 0.0, %v862
      %v864 = vpop.f32.mrf.mxu0
      %v865 = vadd.f32 0.0, %v864
      %866 = vmatprep.mubr.bf16.mxu0 0
      %867 = vmatmul.mubr.bf16.gmra.mxu0 %v689
      %v868 = vpop.f32.mrf.mxu0
      %v869 = vadd.f32 0.0, %v868
      %v870 = vpop.f32.mrf.mxu0
      %v871 = vadd.f32 0.0, %v870
      %v872 = vpop.f32.mrf.mxu0
      %v873 = vadd.f32 0.0, %v872
      %v874 = vpop.f32.mrf.mxu0
      %v875 = vadd.f32 0.0, %v874
      %876 = vmatprep.mubr.bf16.mxu0 0
      %877 = vmatmul.mubr.bf16.gmra.mxu0 %v692
      %v878 = vpop.f32.mrf.mxu0
      %v879 = vadd.f32 0.0, %v878
      %v880 = vpop.f32.mrf.mxu0
      %v881 = vadd.f32 0.0, %v880
      %v882 = vpop.f32.mrf.mxu0
      %v883 = vadd.f32 0.0, %v882
      %v884 = vpop.f32.mrf.mxu0
      %v885 = vadd.f32 0.0, %v884
      %886 = vdwg.mxu0
      %v887 = vmax.f32 %v729, %v731
      %888 = vmax.xlane.f32.xlu0 %v887
      %v889 = vpop.xlane.xlu0 %888
      %v890 = vmax.f32 %v733, %v735
      %891 = vmax.xlane.f32.xlu0 %v890
      %v892 = vpop.xlane.xlu0 %891
      %v893 = vmax.f32 %v739, %v741
      %894 = vmax.xlane.f32.xlu0 %v893
      %v895 = vpop.xlane.xlu0 %894
      %v896 = vmax.f32 %v743, %v745
      %897 = vmax.xlane.f32.xlu0 %v896
      %v898 = vpop.xlane.xlu0 %897
      %v899 = vmax.f32 %v749, %v751
      %900 = vmax.xlane.f32.xlu0 %v899
      %v901 = vpop.xlane.xlu0 %900
      %v902 = vmax.f32 %v753, %v755
      %903 = vmax.xlane.f32.xlu0 %v902
      %v904 = vpop.xlane.xlu0 %903
      %v905 = vmax.f32 %v759, %v761
      %906 = vmax.xlane.f32.xlu0 %v905
      %v907 = vpop.xlane.xlu0 %906
      %v908 = vmax.f32 %v763, %v765
      %909 = vmax.xlane.f32.xlu0 %v908
      %v910 = vpop.xlane.xlu0 %909
      %v911 = vmax.f32 %v769, %v771
      %912 = vmax.xlane.f32.xlu0 %v911
      %v913 = vpop.xlane.xlu0 %912
      %v914 = vmax.f32 %v773, %v775
      %915 = vmax.xlane.f32.xlu0 %v914
      %v916 = vpop.xlane.xlu0 %915
      %v917 = vmax.f32 %v779, %v781
      %918 = vmax.xlane.f32.xlu0 %v917
      %v919 = vpop.xlane.xlu0 %918
      %v920 = vmax.f32 %v783, %v785
      %921 = vmax.xlane.f32.xlu0 %v920
      %v922 = vpop.xlane.xlu0 %921
      %v923 = vmax.f32 %v789, %v791
      %924 = vmax.xlane.f32.xlu0 %v923
      %v925 = vpop.xlane.xlu0 %924
      %v926 = vmax.f32 %v793, %v795
      %927 = vmax.xlane.f32.xlu0 %v926
      %v928 = vpop.xlane.xlu0 %927
      %v929 = vmax.f32 %v799, %v801
      %930 = vmax.xlane.f32.xlu0 %v929
      %v931 = vpop.xlane.xlu0 %930
      %v932 = vmax.f32 %v803, %v805
      %933 = vmax.xlane.f32.xlu0 %v932
      %v934 = vpop.xlane.xlu0 %933
      %v935 = vmax.f32 %v809, %v811
      %936 = vmax.xlane.f32.xlu0 %v935
      %v937 = vpop.xlane.xlu0 %936
      %v938 = vmax.f32 %v813, %v815
      %939 = vmax.xlane.f32.xlu0 %v938
      %v940 = vpop.xlane.xlu0 %939
      %v941 = vmax.f32 %v819, %v821
      %942 = vmax.xlane.f32.xlu0 %v941
      %v943 = vpop.xlane.xlu0 %942
      %v944 = vmax.f32 %v823, %v825
      %945 = vmax.xlane.f32.xlu0 %v944
      %v946 = vpop.xlane.xlu0 %945
      %v947 = vmax.f32 %v829, %v831
      %948 = vmax.xlane.f32.xlu0 %v947
      %v949 = vpop.xlane.xlu0 %948
      %v950 = vmax.f32 %v833, %v835
      %951 = vmax.xlane.f32.xlu0 %v950
      %v952 = vpop.xlane.xlu0 %951
      %v953 = vmax.f32 %v839, %v841
      %954 = vmax.xlane.f32.xlu0 %v953
      %v955 = vpop.xlane.xlu0 %954
      %v956 = vmax.f32 %v843, %v845
      %957 = vmax.xlane.f32.xlu0 %v956
      %v958 = vpop.xlane.xlu0 %957
      %v959 = vmax.f32 %v849, %v851
      %960 = vmax.xlane.f32.xlu0 %v959
      %v961 = vpop.xlane.xlu0 %960
      %v962 = vmax.f32 %v853, %v855
      %963 = vmax.xlane.f32.xlu0 %v962
      %v964 = vpop.xlane.xlu0 %963
      %v965 = vmax.f32 %v859, %v861
      %966 = vmax.xlane.f32.xlu0 %v965
      %v967 = vpop.xlane.xlu0 %966
      %v968 = vmax.f32 %v863, %v865
      %969 = vmax.xlane.f32.xlu0 %v968
      %v970 = vpop.xlane.xlu0 %969
      %v971 = vmax.f32 %v869, %v871
      %972 = vmax.xlane.f32.xlu0 %v971
      %v973 = vpop.xlane.xlu0 %972
      %v974 = vmax.f32 %v873, %v875
      %975 = vmax.xlane.f32.xlu0 %v974
      %v976 = vpop.xlane.xlu0 %975
      %v977 = vmax.f32 %v879, %v881
      %978 = vmax.xlane.f32.xlu0 %v977
      %v979 = vpop.xlane.xlu0 %978
      %v980 = vmax.f32 %v883, %v885
      %981 = vmax.xlane.f32.xlu0 %v980
      %v982 = vpop.xlane.xlu0 %981
      %v983 = vsub.f32 %v729, %v889
      %v984 = vsub.f32 %v731, %v889
      %v985 = vsub.f32 %v733, %v892
      %v986 = vsub.f32 %v735, %v892
      %v987 = vsub.f32 %v739, %v895
      %v988 = vsub.f32 %v741, %v895
      %v989 = vsub.f32 %v743, %v898
      %v990 = vsub.f32 %v745, %v898
      %v991 = vsub.f32 %v749, %v901
      %v992 = vsub.f32 %v751, %v901
      %v993 = vsub.f32 %v753, %v904
      %v994 = vsub.f32 %v755, %v904
      %v995 = vsub.f32 %v759, %v907
      %v996 = vsub.f32 %v761, %v907
      %v997 = vsub.f32 %v763, %v910
      %v998 = vsub.f32 %v765, %v910
      %v999 = vsub.f32 %v769, %v913
      %v1000 = vsub.f32 %v771, %v913
      %v1001 = vsub.f32 %v773, %v916
      %v1002 = vsub.f32 %v775, %v916
      %v1003 = vsub.f32 %v779, %v919
      %v1004 = vsub.f32 %v781, %v919
      %v1005 = vsub.f32 %v783, %v922
      %v1006 = vsub.f32 %v785, %v922
      %v1007 = vsub.f32 %v789, %v925
      %v1008 = vsub.f32 %v791, %v925
      %v1009 = vsub.f32 %v793, %v928
      %v1010 = vsub.f32 %v795, %v928
      %v1011 = vsub.f32 %v799, %v931
      %v1012 = vsub.f32 %v801, %v931
      %v1013 = vsub.f32 %v803, %v934
      %v1014 = vsub.f32 %v805, %v934
      %v1015 = vsub.f32 %v809, %v937
      %v1016 = vsub.f32 %v811, %v937
      %v1017 = vsub.f32 %v813, %v940
      %v1018 = vsub.f32 %v815, %v940
      %v1019 = vsub.f32 %v819, %v943
      %v1020 = vsub.f32 %v821, %v943
      %v1021 = vsub.f32 %v823, %v946
      %v1022 = vsub.f32 %v825, %v946
      %v1023 = vsub.f32 %v829, %v949
      %v1024 = vsub.f32 %v831, %v949
      %v1025 = vsub.f32 %v833, %v952
      %v1026 = vsub.f32 %v835, %v952
      %v1027 = vsub.f32 %v839, %v955
      %v1028 = vsub.f32 %v841, %v955
      %v1029 = vsub.f32 %v843, %v958
      %v1030 = vsub.f32 %v845, %v958
      %v1031 = vsub.f32 %v849, %v961
      %v1032 = vsub.f32 %v851, %v961
      %v1033 = vsub.f32 %v853, %v964
      %v1034 = vsub.f32 %v855, %v964
      %v1035 = vsub.f32 %v859, %v967
      %v1036 = vsub.f32 %v861, %v967
      %v1037 = vsub.f32 %v863, %v970
      %v1038 = vsub.f32 %v865, %v970
      %v1039 = vsub.f32 %v869, %v973
      %v1040 = vsub.f32 %v871, %v973
      %v1041 = vsub.f32 %v873, %v976
      %v1042 = vsub.f32 %v875, %v976
      %v1043 = vsub.f32 %v879, %v979
      %v1044 = vsub.f32 %v881, %v979
      %v1045 = vsub.f32 %v883, %v982
      %v1046 = vsub.f32 %v885, %v982
      %v1047 = vmul.f32 %v983, 1.442695
      %v1048 = vpow.pop %v1047
      %v1049 = vmul.f32 %v984, 1.442695
      %v1050 = vpow.pop %v1049
      %v1051 = vmul.f32 %v985, 1.442695
      %v1052 = vpow.pop %v1051
      %v1053 = vmul.f32 %v986, 1.442695
      %v1054 = vpow.pop %v1053
      %v1055 = vmul.f32 %v987, 1.442695
      %v1056 = vpow.pop %v1055
      %v1057 = vmul.f32 %v988, 1.442695
      %v1058 = vpow.pop %v1057
      %v1059 = vmul.f32 %v989, 1.442695
      %v1060 = vpow.pop %v1059
      %v1061 = vmul.f32 %v990, 1.442695
      %v1062 = vpow.pop %v1061
      %v1063 = vmul.f32 %v991, 1.442695
      %v1064 = vpow.pop %v1063
      %v1065 = vmul.f32 %v992, 1.442695
      %v1066 = vpow.pop %v1065
      %v1067 = vmul.f32 %v993, 1.442695
      %v1068 = vpow.pop %v1067
      %v1069 = vmul.f32 %v994, 1.442695
      %v1070 = vpow.pop %v1069
      %v1071 = vmul.f32 %v995, 1.442695
      %v1072 = vpow.pop %v1071
      %v1073 = vmul.f32 %v996, 1.442695
      %v1074 = vpow.pop %v1073
      %v1075 = vmul.f32 %v997, 1.442695
      %v1076 = vpow.pop %v1075
      %v1077 = vmul.f32 %v998, 1.442695
      %v1078 = vpow.pop %v1077
      %v1079 = vmul.f32 %v999, 1.442695
      %v1080 = vpow.pop %v1079
      %v1081 = vmul.f32 %v1000, 1.442695
      %v1082 = vpow.pop %v1081
      %v1083 = vmul.f32 %v1001, 1.442695
      %v1084 = vpow.pop %v1083
      %v1085 = vmul.f32 %v1002, 1.442695
      %v1086 = vpow.pop %v1085
      %v1087 = vmul.f32 %v1003, 1.442695
      %v1088 = vpow.pop %v1087
      %v1089 = vmul.f32 %v1004, 1.442695
      %v1090 = vpow.pop %v1089
      %v1091 = vmul.f32 %v1005, 1.442695
      %v1092 = vpow.pop %v1091
      %v1093 = vmul.f32 %v1006, 1.442695
      %v1094 = vpow.pop %v1093
      %v1095 = vmul.f32 %v1007, 1.442695
      %v1096 = vpow.pop %v1095
      %v1097 = vmul.f32 %v1008, 1.442695
      %v1098 = vpow.pop %v1097
      %v1099 = vmul.f32 %v1009, 1.442695
      %v1100 = vpow.pop %v1099
      %v1101 = vmul.f32 %v1010, 1.442695
      %v1102 = vpow.pop %v1101
      %v1103 = vmul.f32 %v1011, 1.442695
      %v1104 = vpow.pop %v1103
      %v1105 = vmul.f32 %v1012, 1.442695
      %v1106 = vpow.pop %v1105
      %v1107 = vmul.f32 %v1013, 1.442695
      %v1108 = vpow.pop %v1107
      %v1109 = vmul.f32 %v1014, 1.442695
      %v1110 = vpow.pop %v1109
      %v1111 = vmul.f32 %v1015, 1.442695
      %v1112 = vpow.pop %v1111
      %v1113 = vmul.f32 %v1016, 1.442695
      %v1114 = vpow.pop %v1113
      %v1115 = vmul.f32 %v1017, 1.442695
      %v1116 = vpow.pop %v1115
      %v1117 = vmul.f32 %v1018, 1.442695
      %v1118 = vpow.pop %v1117
      %v1119 = vmul.f32 %v1019, 1.442695
      %v1120 = vpow.pop %v1119
      %v1121 = vmul.f32 %v1020, 1.442695
      %v1122 = vpow.pop %v1121
      %v1123 = vmul.f32 %v1021, 1.442695
      %v1124 = vpow.pop %v1123
      %v1125 = vmul.f32 %v1022, 1.442695
      %v1126 = vpow.pop %v1125
      %v1127 = vmul.f32 %v1023, 1.442695
      %v1128 = vpow.pop %v1127
      %v1129 = vmul.f32 %v1024, 1.442695
      %v1130 = vpow.pop %v1129
      %v1131 = vmul.f32 %v1025, 1.442695
      %v1132 = vpow.pop %v1131
      %v1133 = vmul.f32 %v1026, 1.442695
      %v1134 = vpow.pop %v1133
      %v1135 = vmul.f32 %v1027, 1.442695
      %v1136 = vpow.pop %v1135
      %v1137 = vmul.f32 %v1028, 1.442695
      %v1138 = vpow.pop %v1137
      %v1139 = vmul.f32 %v1029, 1.442695
      %v1140 = vpow.pop %v1139
      %v1141 = vmul.f32 %v1030, 1.442695
      %v1142 = vpow.pop %v1141
      %v1143 = vmul.f32 %v1031, 1.442695
      %v1144 = vpow.pop %v1143
      %v1145 = vmul.f32 %v1032, 1.442695
      %v1146 = vpow.pop %v1145
      %v1147 = vmul.f32 %v1033, 1.442695
      %v1148 = vpow.pop %v1147
      %v1149 = vmul.f32 %v1034, 1.442695
      %v1150 = vpow.pop %v1149
      %v1151 = vmul.f32 %v1035, 1.442695
      %v1152 = vpow.pop %v1151
      %v1153 = vmul.f32 %v1036, 1.442695
      %v1154 = vpow.pop %v1153
      %v1155 = vmul.f32 %v1037, 1.442695
      %v1156 = vpow.pop %v1155
      %v1157 = vmul.f32 %v1038, 1.442695
      %v1158 = vpow.pop %v1157
      %v1159 = vmul.f32 %v1039, 1.442695
      %v1160 = vpow.pop %v1159
      %v1161 = vmul.f32 %v1040, 1.442695
      %v1162 = vpow.pop %v1161
      %v1163 = vmul.f32 %v1041, 1.442695
      %v1164 = vpow.pop %v1163
      %v1165 = vmul.f32 %v1042, 1.442695
      %v1166 = vpow.pop %v1165
      %v1167 = vmul.f32 %v1043, 1.442695
      %v1168 = vpow.pop %v1167
      %v1169 = vmul.f32 %v1044, 1.442695
      %v1170 = vpow.pop %v1169
      %v1171 = vmul.f32 %v1045, 1.442695
      %v1172 = vpow.pop %v1171
      %v1173 = vmul.f32 %v1046, 1.442695
      %v1174 = vpow.pop %v1173
      %v1175 = vadd.f32 %v1048, %v1050
      %1176 = vadd.xlane.f32.xlu0 %v1175
      %v1177 = vpop.xlane.xlu0 %1176
      %v1178 = vadd.f32 %v1052, %v1054
      %1179 = vadd.xlane.f32.xlu0 %v1178
      %v1180 = vpop.xlane.xlu0 %1179
      %v1181 = vadd.f32 %v1056, %v1058
      %1182 = vadd.xlane.f32.xlu0 %v1181
      %v1183 = vpop.xlane.xlu0 %1182
      %v1184 = vadd.f32 %v1060, %v1062
      %1185 = vadd.xlane.f32.xlu0 %v1184
      %v1186 = vpop.xlane.xlu0 %1185
      %v1187 = vadd.f32 %v1064, %v1066
      %1188 = vadd.xlane.f32.xlu0 %v1187
      %v1189 = vpop.xlane.xlu0 %1188
      %v1190 = vadd.f32 %v1068, %v1070
      %1191 = vadd.xlane.f32.xlu0 %v1190
      %v1192 = vpop.xlane.xlu0 %1191
      %v1193 = vadd.f32 %v1072, %v1074
      %1194 = vadd.xlane.f32.xlu0 %v1193
      %v1195 = vpop.xlane.xlu0 %1194
      %v1196 = vadd.f32 %v1076, %v1078
      %1197 = vadd.xlane.f32.xlu0 %v1196
      %v1198 = vpop.xlane.xlu0 %1197
      %v1199 = vadd.f32 %v1080, %v1082
      %1200 = vadd.xlane.f32.xlu0 %v1199
      %v1201 = vpop.xlane.xlu0 %1200
      %v1202 = vadd.f32 %v1084, %v1086
      %1203 = vadd.xlane.f32.xlu0 %v1202
      %v1204 = vpop.xlane.xlu0 %1203
      %v1205 = vadd.f32 %v1088, %v1090
      %1206 = vadd.xlane.f32.xlu0 %v1205
      %v1207 = vpop.xlane.xlu0 %1206
      %v1208 = vadd.f32 %v1092, %v1094
      %1209 = vadd.xlane.f32.xlu0 %v1208
      %v1210 = vpop.xlane.xlu0 %1209
      %v1211 = vadd.f32 %v1096, %v1098
      %1212 = vadd.xlane.f32.xlu0 %v1211
      %v1213 = vpop.xlane.xlu0 %1212
      %v1214 = vadd.f32 %v1100, %v1102
      %1215 = vadd.xlane.f32.xlu0 %v1214
      %v1216 = vpop.xlane.xlu0 %1215
      %v1217 = vadd.f32 %v1104, %v1106
      %1218 = vadd.xlane.f32.xlu0 %v1217
      %v1219 = vpop.xlane.xlu0 %1218
      %v1220 = vadd.f32 %v1108, %v1110
      %1221 = vadd.xlane.f32.xlu0 %v1220
      %v1222 = vpop.xlane.xlu0 %1221
      %v1223 = vadd.f32 %v1112, %v1114
      %1224 = vadd.xlane.f32.xlu0 %v1223
      %v1225 = vpop.xlane.xlu0 %1224
      %v1226 = vadd.f32 %v1116, %v1118
      %1227 = vadd.xlane.f32.xlu0 %v1226
      %v1228 = vpop.xlane.xlu0 %1227
      %v1229 = vadd.f32 %v1120, %v1122
      %1230 = vadd.xlane.f32.xlu0 %v1229
      %v1231 = vpop.xlane.xlu0 %1230
      %v1232 = vadd.f32 %v1124, %v1126
      %1233 = vadd.xlane.f32.xlu0 %v1232
      %v1234 = vpop.xlane.xlu0 %1233
      %v1235 = vadd.f32 %v1128, %v1130
      %1236 = vadd.xlane.f32.xlu0 %v1235
      %v1237 = vpop.xlane.xlu0 %1236
      %v1238 = vadd.f32 %v1132, %v1134
      %1239 = vadd.xlane.f32.xlu0 %v1238
      %v1240 = vpop.xlane.xlu0 %1239
      %v1241 = vadd.f32 %v1136, %v1138
      %1242 = vadd.xlane.f32.xlu0 %v1241
      %v1243 = vpop.xlane.xlu0 %1242
      %v1244 = vadd.f32 %v1140, %v1142
      %1245 = vadd.xlane.f32.xlu0 %v1244
      %v1246 = vpop.xlane.xlu0 %1245
      %v1247 = vadd.f32 %v1144, %v1146
      %1248 = vadd.xlane.f32.xlu0 %v1247
      %v1249 = vpop.xlane.xlu0 %1248
      %v1250 = vadd.f32 %v1148, %v1150
      %1251 = vadd.xlane.f32.xlu0 %v1250
      %v1252 = vpop.xlane.xlu0 %1251
      %v1253 = vadd.f32 %v1152, %v1154
      %1254 = vadd.xlane.f32.xlu0 %v1253
      %v1255 = vpop.xlane.xlu0 %1254
      %v1256 = vadd.f32 %v1156, %v1158
      %1257 = vadd.xlane.f32.xlu0 %v1256
      %v1258 = vpop.xlane.xlu0 %1257
      %v1259 = vadd.f32 %v1160, %v1162
      %1260 = vadd.xlane.f32.xlu0 %v1259
      %v1261 = vpop.xlane.xlu0 %1260
      %v1262 = vadd.f32 %v1164, %v1166
      %1263 = vadd.xlane.f32.xlu0 %v1262
      %v1264 = vpop.xlane.xlu0 %1263
      %v1265 = vadd.f32 %v1168, %v1170
      %1266 = vadd.xlane.f32.xlu0 %v1265
      %v1267 = vpop.xlane.xlu0 %1266
      %v1268 = vadd.f32 %v1172, %v1174
      %1269 = vadd.xlane.f32.xlu0 %v1268
      %v1270 = vpop.xlane.xlu0 %1269
      %v1271 = vrcp.pop %v1177
      %v1272 = vrcp.pop %v1180
      %v1273 = vrcp.pop %v1183
      %v1274 = vrcp.pop %v1186
      %v1275 = vrcp.pop %v1189
      %v1276 = vrcp.pop %v1192
      %v1277 = vrcp.pop %v1195
      %v1278 = vrcp.pop %v1198
      %v1279 = vrcp.pop %v1201
      %v1280 = vrcp.pop %v1204
      %v1281 = vrcp.pop %v1207
      %v1282 = vrcp.pop %v1210
      %v1283 = vrcp.pop %v1213
      %v1284 = vrcp.pop %v1216
      %v1285 = vrcp.pop %v1219
      %v1286 = vrcp.pop %v1222
      %v1287 = vrcp.pop %v1225
      %v1288 = vrcp.pop %v1228
      %v1289 = vrcp.pop %v1231
      %v1290 = vrcp.pop %v1234
      %v1291 = vrcp.pop %v1237
      %v1292 = vrcp.pop %v1240
      %v1293 = vrcp.pop %v1243
      %v1294 = vrcp.pop %v1246
      %v1295 = vrcp.pop %v1249
      %v1296 = vrcp.pop %v1252
      %v1297 = vrcp.pop %v1255
      %v1298 = vrcp.pop %v1258
      %v1299 = vrcp.pop %v1261
      %v1300 = vrcp.pop %v1264
      %v1301 = vrcp.pop %v1267
      %v1302 = vrcp.pop %v1270
      %v1303 = vmul.f32 %v1048, %v1271
      %v1304 = vmul.f32 %v1050, %v1271
      %v1305 = vmul.f32 %v1052, %v1272
      %v1306 = vmul.f32 %v1054, %v1272
      %v1307 = vmul.f32 %v1056, %v1273
      %v1308 = vmul.f32 %v1058, %v1273
      %v1309 = vmul.f32 %v1060, %v1274
      %v1310 = vmul.f32 %v1062, %v1274
      %v1311 = vmul.f32 %v1064, %v1275
      %v1312 = vmul.f32 %v1066, %v1275
      %v1313 = vmul.f32 %v1068, %v1276
      %v1314 = vmul.f32 %v1070, %v1276
      %v1315 = vmul.f32 %v1072, %v1277
      %v1316 = vmul.f32 %v1074, %v1277
      %v1317 = vmul.f32 %v1076, %v1278
      %v1318 = vmul.f32 %v1078, %v1278
      %v1319 = vmul.f32 %v1080, %v1279
      %v1320 = vmul.f32 %v1082, %v1279
      %v1321 = vmul.f32 %v1084, %v1280
      %v1322 = vmul.f32 %v1086, %v1280
      %v1323 = vmul.f32 %v1088, %v1281
      %v1324 = vmul.f32 %v1090, %v1281
      %v1325 = vmul.f32 %v1092, %v1282
      %v1326 = vmul.f32 %v1094, %v1282
      %v1327 = vmul.f32 %v1096, %v1283
      %v1328 = vmul.f32 %v1098, %v1283
      %v1329 = vmul.f32 %v1100, %v1284
      %v1330 = vmul.f32 %v1102, %v1284
      %v1331 = vmul.f32 %v1104, %v1285
      %v1332 = vmul.f32 %v1106, %v1285
      %v1333 = vmul.f32 %v1108, %v1286
      %v1334 = vmul.f32 %v1110, %v1286
      %v1335 = vmul.f32 %v1112, %v1287
      %v1336 = vmul.f32 %v1114, %v1287
      %v1337 = vmul.f32 %v1116, %v1288
      %v1338 = vmul.f32 %v1118, %v1288
      %v1339 = vmul.f32 %v1120, %v1289
      %v1340 = vmul.f32 %v1122, %v1289
      %v1341 = vmul.f32 %v1124, %v1290
      %v1342 = vmul.f32 %v1126, %v1290
      %v1343 = vmul.f32 %v1128, %v1291
      %v1344 = vmul.f32 %v1130, %v1291
      %v1345 = vmul.f32 %v1132, %v1292
      %v1346 = vmul.f32 %v1134, %v1292
      %v1347 = vmul.f32 %v1136, %v1293
      %v1348 = vmul.f32 %v1138, %v1293
      %v1349 = vmul.f32 %v1140, %v1294
      %v1350 = vmul.f32 %v1142, %v1294
      %v1351 = vmul.f32 %v1144, %v1295
      %v1352 = vmul.f32 %v1146, %v1295
      %v1353 = vmul.f32 %v1148, %v1296
      %v1354 = vmul.f32 %v1150, %v1296
      %v1355 = vmul.f32 %v1152, %v1297
      %v1356 = vmul.f32 %v1154, %v1297
      %v1357 = vmul.f32 %v1156, %v1298
      %v1358 = vmul.f32 %v1158, %v1298
      %v1359 = vmul.f32 %v1160, %v1299
      %v1360 = vmul.f32 %v1162, %v1299
      %v1361 = vmul.f32 %v1164, %v1300
      %v1362 = vmul.f32 %v1166, %v1300
      %v1363 = vmul.f32 %v1168, %v1301
      %v1364 = vmul.f32 %v1170, %v1301
      %v1365 = vmul.f32 %v1172, %v1302
      %v1366 = vmul.f32 %v1174, %v1302
      %v1367 = vpack.c.bf16 %v1305, %v1303
      %v1368 = vpack.c.bf16 %v1306, %v1304
      %v1369 = vpack.c.bf16 %v1309, %v1307
      %v1370 = vpack.c.bf16 %v1310, %v1308
      %v1371 = vpack.c.bf16 %v1313, %v1311
      %v1372 = vpack.c.bf16 %v1314, %v1312
      %v1373 = vpack.c.bf16 %v1317, %v1315
      %v1374 = vpack.c.bf16 %v1318, %v1316
      %v1375 = vpack.c.bf16 %v1321, %v1319
      %v1376 = vpack.c.bf16 %v1322, %v1320
      %v1377 = vpack.c.bf16 %v1325, %v1323
      %v1378 = vpack.c.bf16 %v1326, %v1324
      %v1379 = vpack.c.bf16 %v1329, %v1327
      %v1380 = vpack.c.bf16 %v1330, %v1328
      %v1381 = vpack.c.bf16 %v1333, %v1331
      %v1382 = vpack.c.bf16 %v1334, %v1332
      %v1383 = vpack.c.bf16 %v1337, %v1335
      %v1384 = vpack.c.bf16 %v1338, %v1336
      %v1385 = vpack.c.bf16 %v1341, %v1339
      %v1386 = vpack.c.bf16 %v1342, %v1340
      %v1387 = vpack.c.bf16 %v1345, %v1343
      %v1388 = vpack.c.bf16 %v1346, %v1344
      %v1389 = vpack.c.bf16 %v1349, %v1347
      %v1390 = vpack.c.bf16 %v1350, %v1348
      %v1391 = vpack.c.bf16 %v1353, %v1351
      %v1392 = vpack.c.bf16 %v1354, %v1352
      %v1393 = vpack.c.bf16 %v1357, %v1355
      %v1394 = vpack.c.bf16 %v1358, %v1356
      %v1395 = vpack.c.bf16 %v1361, %v1359
      %v1396 = vpack.c.bf16 %v1362, %v1360
      %v1397 = vpack.c.bf16 %v1365, %v1363
      %v1398 = vpack.c.bf16 %v1366, %v1364
      %1399 = vmatprep.subr.bf16.mxu0 %v1382
      %1400 = vmatpush1.bf16.xpose.msra.mxu0 %v1381
      %1401 = vmatprep.subr.bf16.mxu0 %v1380
      %1402 = vmatpush1.bf16.xpose.msra.mxu0 %v1379
      %1403 = vmatprep.subr.bf16.mxu0 %v1378
      %1404 = vmatpush1.bf16.xpose.msra.mxu0 %v1377
      %1405 = vmatprep.subr.bf16.mxu0 %v1376
      %1406 = vmatpush1.bf16.xpose.msra.mxu0 %v1375
      %1407 = vmatprep.subr.bf16.mxu0 %v1374
      %1408 = vmatpush1.bf16.xpose.msra.mxu0 %v1373
      %1409 = vmatprep.subr.bf16.mxu0 %v1372
      %1410 = vmatpush1.bf16.xpose.msra.mxu0 %v1371
      %1411 = vmatprep.subr.bf16.mxu0 %v1370
      %1412 = vmatpush1.bf16.xpose.msra.mxu0 %v1369
      %1413 = vmatprep.subr.bf16.mxu0 %v1368
      %1414 = vmatpush1.bf16.xpose.msra.mxu0 %v1367
      %1415 = vmatprep.subr.bf16.mxu0 %v1398
      %1416 = vmatpush2.bf16.xpose.msra.mxu0 %v1397
      %1417 = vmatprep.subr.bf16.mxu0 %v1396
      %1418 = vmatpush2.bf16.xpose.msra.mxu0 %v1395
      %1419 = vmatprep.subr.bf16.mxu0 %v1394
      %1420 = vmatpush2.bf16.xpose.msra.mxu0 %v1393
      %1421 = vmatprep.subr.bf16.mxu0 %v1392
      %1422 = vmatpush2.bf16.xpose.msra.mxu0 %v1391
      %1423 = vmatprep.subr.bf16.mxu0 %v1390
      %1424 = vmatpush2.bf16.xpose.msra.mxu0 %v1389
      %1425 = vmatprep.subr.bf16.mxu0 %v1388
      %1426 = vmatpush2.bf16.xpose.msra.mxu0 %v1387
      %1427 = vmatprep.subr.bf16.mxu0 %v1386
      %1428 = vmatpush2.bf16.xpose.msra.mxu0 %v1385
      %1429 = vmatprep.subr.bf16.mxu0 %v1384
      %1430 = vmatpush2.bf16.xpose.msra.mxu0 %v1383
      %1431 = vmatprep.mubr.bf16.mxu0 %v294
      %1432 = vmatmul.mubr.bf16.gmra.mxu0 %v293
      %v1433 = vpop.f32.mrf.mxu0
      %v1434 = vadd.f32 0.0, %v1433
      %v1435 = vpop.f32.mrf.mxu0
      %v1436 = vadd.f32 0.0, %v1435
      %v1437 = vpop.f32.mrf.mxu0
      %v1438 = vadd.f32 0.0, %v1437
      %v1439 = vpop.f32.mrf.mxu0
      %v1440 = vadd.f32 0.0, %v1439
      %1441 = vmatprep.mubr.bf16.mxu0 %v296
      %1442 = vmatmul.mubr.bf16.gmra.mxu0 %v295
      %v1443 = vpop.f32.mrf.mxu0
      %v1444 = vadd.f32 0.0, %v1443
      %v1445 = vpop.f32.mrf.mxu0
      %v1446 = vadd.f32 0.0, %v1445
      %v1447 = vpop.f32.mrf.mxu0
      %v1448 = vadd.f32 0.0, %v1447
      %v1449 = vpop.f32.mrf.mxu0
      %v1450 = vadd.f32 0.0, %v1449
      %1451 = vmatprep.mubr.bf16.mxu0 %v298
      %1452 = vmatmul.mubr.bf16.gmra.mxu0 %v297
      %v1453 = vpop.f32.mrf.mxu0
      %v1454 = vadd.f32 0.0, %v1453
      %v1455 = vpop.f32.mrf.mxu0
      %v1456 = vadd.f32 0.0, %v1455
      %v1457 = vpop.f32.mrf.mxu0
      %v1458 = vadd.f32 0.0, %v1457
      %v1459 = vpop.f32.mrf.mxu0
      %v1460 = vadd.f32 0.0, %v1459
      %1461 = vmatprep.mubr.bf16.mxu0 %v300
      %1462 = vmatmul.mubr.bf16.gmra.mxu0 %v299
      %v1463 = vpop.f32.mrf.mxu0
      %v1464 = vadd.f32 0.0, %v1463
      %v1465 = vpop.f32.mrf.mxu0
      %v1466 = vadd.f32 0.0, %v1465
      %v1467 = vpop.f32.mrf.mxu0
      %v1468 = vadd.f32 0.0, %v1467
      %v1469 = vpop.f32.mrf.mxu0
      %v1470 = vadd.f32 0.0, %v1469
      %1471 = vdwg.mxu0
      %v1472 = vld [vmem:[%s3] sm:$0xf]
      %v1473 = vld [vmem:[%s3 + $0x4] sm:$0xf]
      %v1474 = vld [vmem:[%s3 + $0x8] sm:$0xf]
      %v1475 = vld [vmem:[%s3 + $0xc] sm:$0xf]
      %v1476 = vld [vmem:[%s3 + $0x10] sm:$0xf]
      %v1477 = vld [vmem:[%s3 + $0x14] sm:$0xf]
      %v1478 = vld [vmem:[%s3 + $0x18] sm:$0xf]
      %v1479 = vld [vmem:[%s3 + $0x1c] sm:$0xf]
      %v1480 = vpack.c.bf16 %v1438, %v1434
      %v1481 = vpack.c.bf16 %v1440, %v1436
      %v1482 = vpack.c.bf16 %v1448, %v1444
      %v1483 = vpack.c.bf16 %v1450, %v1446
      %v1484 = vpack.c.bf16 %v1458, %v1454
      %v1485 = vpack.c.bf16 %v1460, %v1456
      %v1486 = vpack.c.bf16 %v1468, %v1464
      %v1487 = vpack.c.bf16 %v1470, %v1466
      %v1488 = vld [vmem:[%s4] sm:$0xff]
      %v1489 = vld [vmem:[%s4 + $0x8] sm:$0xff]
      %v1490 = vld [vmem:[%s4 + $0x10] sm:$0xff]
      %v1491 = vld [vmem:[%s4 + $0x18] sm:$0xff]
      %v1492 = vld [vmem:[%s4 + $0x20] sm:$0xff]
      %v1493 = vld [vmem:[%s4 + $0x28] sm:$0xff]
      %v1494 = vld [vmem:[%s4 + $0x30] sm:$0xff]
      %v1495 = vld [vmem:[%s4 + $0x38] sm:$0xff]
      %1497 = vset.pattern.permute.xlu0 0
      %1498 = vperm.xlu0 %1497, %v1488
      %v1499 = vpop.permute.xlu0 %1498
      %1502 = vset.pattern.permute.xlu0 0
      %1503 = vperm.xlu0 %1502, %v1489
      %v1504 = vpop.permute.xlu0 %1503
      %1507 = vset.pattern.permute.xlu0 0
      %1508 = vperm.xlu0 %1507, %v1490
      %v1509 = vpop.permute.xlu0 %1508
      %1512 = vset.pattern.permute.xlu0 0
      %1513 = vperm.xlu0 %1512, %v1491
      %v1514 = vpop.permute.xlu0 %1513
      %1517 = vset.pattern.permute.xlu0 0
      %1518 = vperm.xlu0 %1517, %v1492
      %v1519 = vpop.permute.xlu0 %1518
      %1522 = vset.pattern.permute.xlu0 0
      %1523 = vperm.xlu0 %1522, %v1493
      %v1524 = vpop.permute.xlu0 %1523
      %1527 = vset.pattern.permute.xlu0 0
      %1528 = vperm.xlu0 %1527, %v1494
      %v1529 = vpop.permute.xlu0 %1528
      %1532 = vset.pattern.permute.xlu0 0
      %1533 = vperm.xlu0 %1532, %v1495
      %v1534 = vpop.permute.xlu0 %1533
      %v1544 = vunpack.c.l.b16 %v1472
      %v1545 = vunpack.c.l.b16 %v1473
      %v1546 = vunpack.c.l.b16 %v1474
      %v1547 = vunpack.c.l.b16 %v1475
      %v1548 = vunpack.c.l.b16 %v1476
      %v1549 = vunpack.c.l.b16 %v1477
      %v1550 = vunpack.c.l.b16 %v1478
      %v1551 = vunpack.c.l.b16 %v1479
      %v1552 = vpack.c.b16 %v1545, %v1544
      %v1553 = vpack.c.b16 %v1547, %v1546
      %v1554 = vpack.c.b16 %v1549, %v1548
      %v1555 = vpack.c.b16 %v1551, %v1550
      %v1557 = vsel %vm420, %v1552, 0
      %v1560 = vsel %vm420, %v1553, 0
      %v1563 = vsel %vm420, %v1554, 0
      %v1566 = vsel %vm420, %v1555, 0
      %1568 = vmatprep.subr.bf16.mxu0 0
      %1569 = vmatpush1.bf16.msra.mxu0 0
      %1570 = vmatprep.subr.bf16.mxu0 0
      %1571 = vmatpush1.bf16.msra.mxu0 0
      %1572 = vmatprep.subr.bf16.mxu0 0
      %1573 = vmatpush1.bf16.msra.mxu0 0
      %1574 = vmatprep.subr.bf16.mxu0 0
      %1575 = vmatpush1.bf16.msra.mxu0 0
      %1576 = vmatprep.subr.bf16.mxu0 %v1487
      %1577 = vmatpush1.bf16.msra.mxu0 %v1486
      %1578 = vmatprep.subr.bf16.mxu0 %v1485
      %1579 = vmatpush1.bf16.msra.mxu0 %v1484
      %1580 = vmatprep.subr.bf16.mxu0 %v1483
      %1581 = vmatpush1.bf16.msra.mxu0 %v1482
      %1582 = vmatprep.subr.bf16.mxu0 %v1481
      %1583 = vmatpush1.bf16.msra.mxu0 %v1480
      %1584 = vmatprep.subr.bf16.mxu0 0
      %1585 = vmatpush2.bf16.msra.mxu0 0
      %1586 = vmatprep.subr.bf16.mxu0 0
      %1587 = vmatpush2.bf16.msra.mxu0 0
      %1588 = vmatprep.subr.bf16.mxu0 0
      %1589 = vmatpush2.bf16.msra.mxu0 0
      %1590 = vmatprep.subr.bf16.mxu0 0
      %1591 = vmatpush2.bf16.msra.mxu0 0
      %1592 = vmatprep.subr.bf16.mxu0 0
      %1593 = vmatpush2.bf16.msra.mxu0 0
      %1594 = vmatprep.subr.bf16.mxu0 0
      %1595 = vmatpush2.bf16.msra.mxu0 0
      %1596 = vmatprep.subr.bf16.mxu0 0
      %1597 = vmatpush2.bf16.msra.mxu0 0
      %1598 = vmatprep.subr.bf16.mxu0 0
      %1599 = vmatpush2.bf16.msra.mxu0 0
      %1600 = vmatprep.mubr.bf16.mxu0 0
      %1601 = vmatmul.mubr.bf16.gmra.mxu0 %v1557
      %v1602 = vpop.f32.mrf.mxu0
      %v1603 = vadd.f32 %v1499, %v1602
      %v1604 = vpop.f32.mrf.mxu0
      %v1605 = vadd.f32 %v1499, %v1604
      %v1606 = vpop.f32.mrf.mxu0
      %v1607 = vadd.f32 %v1504, %v1606
      %v1608 = vpop.f32.mrf.mxu0
      %v1609 = vadd.f32 %v1504, %v1608
      %1610 = vmatprep.mubr.bf16.mxu0 0
      %1611 = vmatmul.mubr.bf16.gmra.mxu0 %v1560
      %v1612 = vpop.f32.mrf.mxu0
      %v1613 = vadd.f32 %v1509, %v1612
      %v1614 = vpop.f32.mrf.mxu0
      %v1615 = vadd.f32 %v1509, %v1614
      %v1616 = vpop.f32.mrf.mxu0
      %v1617 = vadd.f32 %v1514, %v1616
      %v1618 = vpop.f32.mrf.mxu0
      %v1619 = vadd.f32 %v1514, %v1618
      %1620 = vmatprep.mubr.bf16.mxu0 0
      %1621 = vmatmul.mubr.bf16.gmra.mxu0 %v1563
      %v1622 = vpop.f32.mrf.mxu0
      %v1623 = vadd.f32 %v1519, %v1622
      %v1624 = vpop.f32.mrf.mxu0
      %v1625 = vadd.f32 %v1519, %v1624
      %v1626 = vpop.f32.mrf.mxu0
      %v1627 = vadd.f32 %v1524, %v1626
      %v1628 = vpop.f32.mrf.mxu0
      %v1629 = vadd.f32 %v1524, %v1628
      %1630 = vmatprep.mubr.bf16.mxu0 0
      %1631 = vmatmul.mubr.bf16.gmra.mxu0 %v1566
      %v1632 = vpop.f32.mrf.mxu0
      %v1633 = vadd.f32 %v1529, %v1632
      %v1634 = vpop.f32.mrf.mxu0
      %v1635 = vadd.f32 %v1529, %v1634
      %v1636 = vpop.f32.mrf.mxu0
      %v1637 = vadd.f32 %v1534, %v1636
      %v1638 = vpop.f32.mrf.mxu0
      %v1639 = vadd.f32 %v1534, %v1638
      %1640 = vdwg.mxu0
      %s1641 = sld [smem:[#allocation2]]
      %v1642 = vstv %s1641
      %v1643 = vmul.f32 %v1642, %v1603
      %v1644 = vmul.f32 %v1642, %v1605
      %v1645 = vmul.f32 %v1642, %v1607
      %v1646 = vmul.f32 %v1642, %v1609
      %v1647 = vmul.f32 %v1642, %v1613
      %v1648 = vmul.f32 %v1642, %v1615
      %v1649 = vmul.f32 %v1642, %v1617
      %v1650 = vmul.f32 %v1642, %v1619
      %v1651 = vmul.f32 %v1642, %v1623
      %v1652 = vmul.f32 %v1642, %v1625
      %v1653 = vmul.f32 %v1642, %v1627
      %v1654 = vmul.f32 %v1642, %v1629
      %v1655 = vmul.f32 %v1642, %v1633
      %v1656 = vmul.f32 %v1642, %v1635
      %v1657 = vmul.f32 %v1642, %v1637
      %v1658 = vmul.f32 %v1642, %v1639
      %v1659 = vadd.f32 %v1643, %v277
      %v1660 = vadd.f32 %v1644, %v278
      %v1661 = vadd.f32 %v1645, %v279
      %v1662 = vadd.f32 %v1646, %v280
      %v1663 = vadd.f32 %v1647, %v281
      %v1664 = vadd.f32 %v1648, %v282
      %v1665 = vadd.f32 %v1649, %v283
      %v1666 = vadd.f32 %v1650, %v284
      %v1667 = vadd.f32 %v1651, %v285
      %v1668 = vadd.f32 %v1652, %v286
      %v1669 = vadd.f32 %v1653, %v287
      %v1670 = vadd.f32 %v1654, %v288
      %v1671 = vadd.f32 %v1655, %v289
      %v1672 = vadd.f32 %v1656, %v290
      %v1673 = vadd.f32 %v1657, %v291
      %v1674 = vadd.f32 %v1658, %v292
      %1675 = vst [vmem:[%s274] sm:$0xff] %v1659
      %1676 = vst [vmem:[%s274 + $0x8] sm:$0xff] %v1660
      %1677 = vst [vmem:[%s274 + $0x10] sm:$0xff] %v1661
      %1678 = vst [vmem:[%s274 + $0x18] sm:$0xff] %v1662
      %1679 = vst [vmem:[%s274 + $0x20] sm:$0xff] %v1663
      %1680 = vst [vmem:[%s274 + $0x28] sm:$0xff] %v1664
      %1681 = vst [vmem:[%s274 + $0x30] sm:$0xff] %v1665
      %1682 = vst [vmem:[%s274 + $0x38] sm:$0xff] %v1666
      %1683 = vst [vmem:[%s274 + $0x40] sm:$0xff] %v1667
      %1684 = vst [vmem:[%s274 + $0x48] sm:$0xff] %v1668
      %1685 = vst [vmem:[%s274 + $0x50] sm:$0xff] %v1669
      %1686 = vst [vmem:[%s274 + $0x58] sm:$0xff] %v1670
      %1687 = vst [vmem:[%s274 + $0x60] sm:$0xff] %v1671
      %1688 = vst [vmem:[%s274 + $0x68] sm:$0xff] %v1672
      %1689 = vst [vmem:[%s274 + $0x70] sm:$0xff] %v1673
      %1690 = vst [vmem:[%s274 + $0x78] sm:$0xff] %v1674
      %s1691 = smul.u32 2, %s23
      %p1692 = scmp.lt.s32.totalorder %s22, 1
      %s1693 = scalar_select %p1692, %s22, 1
      %p1694 = scmp.lt.s32.totalorder %s1691, 1
      %s1695 = scalar_select %p1694, %s1691, 1
      %s1696 = smul.addr %s1693, 16
      %s1697 = sadd.s32 %s1695, %s1696
      %s1698 = smul.addr %s1697, 8
      %s1699 = scalar_lea.vmem %s6, %s1698
      // Predicated region
      $region45: #{self_attn_dynamic.1} parent=43 // pred_check
        %p1700 = pneg %p181
      $region46: #{self_attn_dynamic.1} parent=43 // pred_check_branch
        %1702 = sbr.rel (%p1700) target = $region48
      $region47: #{self_attn_dynamic.1} parent=43 // pred_region
        %s1703 = smul.u32 2, %s23
      $region48: #{self_attn_dynamic.1} parent=43 // pred_fallthru
        _
    $region44: #{self_attn_dynamic.1} parent=5 // pred_fallthru
      _
    %p1704 = scmp.le.s32.totalorder 2, %s13
    // Predicated region
    $region49: #{self_attn_dynamic.1} parent=5 // pred_check
      %p1705 = pneg %p1704
    $region50: #{self_attn_dynamic.1} parent=5 // pred_check_branch
      %1707 = sbr.rel (%p1705) target = $region52
    $region51: #{self_attn_dynamic.1} parent=5 // pred_region
      %s1708 = ssub.s32 %s13, 2
      // Predicated region
      $region53: #{self_attn_dynamic.1} parent=51 // pred_check
        %p1709 = pneg %p187
      $region54: #{self_attn_dynamic.1} parent=51 // pred_check_branch
        %1711 = sbr.rel (%p1709) target = $region56
      $region55: #{self_attn_dynamic.1} parent=51 // pred_region
        %s1712 = smul.u32 2, %s25
        %p1713 = scmp.lt.s32.totalorder %s24, 1
        %s1714 = scalar_select %p1713, %s24, 1
        %p1715 = scmp.lt.s32.totalorder %s1712, 1
        %s1716 = scalar_select %p1715, %s1712, 1
        %s1717 = smul.addr %s1714, 16
        %s1718 = sadd.s32 %s1716, %s1717
        %s1719 = smul.addr %s1718, 8
        %s1720 = scalar_lea.vmem %s6, %s1719
      $region56: #{self_attn_dynamic.1} parent=51 // pred_fallthru
        _
    $region52: #{self_attn_dynamic.1} parent=5 // pred_fallthru
      _
  $region6: #{self_attn_dynamic.1} parent=0 // loop_footer
    %s17 = sadd.s32 1, %s13
  $region7: #{self_attn_dynamic.1} parent=0 // loop_footer_branch
    %12 = sbr.rel target = $region3
  $region8: #{self_attn_dynamic.1} parent=0 // loop_exit
    _

</llo_original>
